<compile_context>
chip_gen: v5e
topology: v5e:2x2
jax: 0.10.0
libtpu: 0.0.40
codegen_flags: <defaults>
</compile_context>

<pallas_src>
import math

import jax
import jax.numpy as jnp
from jax import lax
from jax.experimental import pallas as pl
from jax.experimental.pallas import tpu as pltpu

# ---- small config consistent with SequenceEncoder(input_dim, max_length, n_heads, hidden_dim, n_layers) ----
B = 2            # batch
T = 8            # sequence length passed to forward (t <= max_length)
D = 32           # input_dim (d_model)
MAX_LEN = 16     # max_length
NH = 4           # n_heads
HD = D // NH     # head dim = 8
F = 64           # hidden_dim (FFN width)
L = 2            # n_layers
EPS = 1e-5       # LayerNorm eps (PyTorch default)


# ---------------------------------------------------------------------------
# Pallas kernel: the whole encoder in one invocation
# ---------------------------------------------------------------------------
def _layer_norm(x, g, b):
    mu = jnp.mean(x, axis=-1, keepdims=True)
    xc = x - mu
    var = jnp.mean(xc * xc, axis=-1, keepdims=True)
    return xc * lax.rsqrt(var + EPS) * g + b


def _encoder_kernel(x_ref, pe_ref, mask_ref,
                    wqkv_ref, bqkv_ref, wo_ref, bo_ref,
                    ln1g_ref, ln1b_ref,
                    wff1_ref, bff1_ref, wff2_ref, bff2_ref,
                    ln2g_ref, ln2b_ref, o_ref):
    # x: (B, T, D); pe: (1, T, D); mask: (T, T) additive (-inf above diagonal)
    x = x_ref[...] + pe_ref[...]
    mask = mask_ref[...]
    xr = x.reshape(B * T, D)                       # rows for dense projections
    scale = 1.0 / math.sqrt(HD)

    for l in range(L):                             # static unroll over layers
        # ---- multi-head self-attention ----
        qkv = jnp.dot(xr, wqkv_ref[l], preferred_element_type=jnp.float32) + bqkv_ref[l]
        q = (qkv[:, 0:D] * scale).reshape(B, T, D)
        k = qkv[:, D:2 * D].reshape(B, T, D)
        v = qkv[:, 2 * D:3 * D].reshape(B, T, D)

        heads = []
        for h in range(NH):                        # static unroll over heads
            sl = slice(h * HD, (h + 1) * HD)
            s = jnp.einsum('bqd,bkd->bqk', q[:, :, sl], k[:, :, sl],
                           preferred_element_type=jnp.float32) + mask
            s = s - jnp.max(s, axis=-1, keepdims=True)
            p = jnp.exp(s)
            p = p / jnp.sum(p, axis=-1, keepdims=True)
            heads.append(jnp.einsum('bqk,bkd->bqd', p, v[:, :, sl],
                                    preferred_element_type=jnp.float32))
        attn = jnp.concatenate(heads, axis=-1).reshape(B * T, D)
        attn = jnp.dot(attn, wo_ref[l], preferred_element_type=jnp.float32) + bo_ref[l]

        # ---- add & norm (post-norm, PyTorch default) ----
        xr = _layer_norm(xr + attn, ln1g_ref[l], ln1b_ref[l])

        # ---- feed-forward (ReLU) ----
        ff = jnp.dot(xr, wff1_ref[l], preferred_element_type=jnp.float32) + bff1_ref[l]
        ff = jnp.maximum(ff, 0.0)
        ff = jnp.dot(ff, wff2_ref[l], preferred_element_type=jnp.float32) + bff2_ref[l]

        # ---- add & norm ----
        xr = _layer_norm(xr + ff, ln2g_ref[l], ln2b_ref[l])

    o_ref[...] = xr.reshape(B, T, D)


# ---------------------------------------------------------------------------
# Wrapper
# ---------------------------------------------------------------------------
@jax.jit
def sequence_encoder_forward(H, params, pe, mask):
    vmem = lambda: pl.BlockSpec(memory_space=pltpu.MemorySpace.VMEM)
    return pl.pallas_call(
        _encoder_kernel,
        out_shape=jax.ShapeDtypeStruct((B, T, D), jnp.float32),
        in_specs=[vmem() for _ in range(15)],
        out_specs=vmem(),
    )(H, pe, mask,
      params['wqkv'], params['bqkv'], params['wo'], params['bo'],
      params['ln1g'], params['ln1b'],
      params['wff1'], params['bff1'], params['wff2'], params['bff2'],
      params['ln2g'], params['ln2b'])


# ---------------------------------------------------------------------------
# Module constants (positional encoding, causal mask) and parameter init
# ---------------------------------------------------------------------------
def positional_encoding(max_length, d):
    pos = jnp.arange(max_length, dtype=jnp.float32)[:, None]
    div = jnp.exp(jnp.arange(0, d, 2, dtype=jnp.float32) * (-math.log(10000.0) / d))
    ang = pos * div
    pe = jnp.zeros((max_length, d), jnp.float32)
    pe = pe.at[:, 0::2].set(jnp.sin(ang)).at[:, 1::2].set(jnp.cos(ang))
    return pe[None]                                  # (1, max_length, d)


def causal_mask(t):
    upper = jnp.triu(jnp.ones((t, t), jnp.float32), k=1)
    return jnp.where(upper == 1.0, -jnp.inf, 0.0).astype(jnp.float32)


def init_params(key):
    ks = jax.random.split(key, 12)

    def xavier(k, shape):
        fan_in, fan_out = shape[-2], shape[-1]
        a = math.sqrt(6.0 / (fan_in + fan_out))
        return jax.random.uniform(k, shape, jnp.float32, -a, a)

    def small(k, shape):
        return 0.05 * jax.random.normal(k, shape, dtype=jnp.float32)

    return dict(
        wqkv=xavier(ks[0], (L, D, 3 * D)), bqkv=small(ks[1], (L, 1, 3 * D)),
        wo=xavier(ks[2], (L, D, D)),       bo=small(ks[3], (L, 1, D)),
        wff1=xavier(ks[4], (L, D, F)),     bff1=small(ks[5], (L, 1, F)),
        wff2=xavier(ks[6], (L, F, D)),     bff2=small(ks[7], (L, 1, D)),
        ln1g=1.0 + small(ks[8], (L, 1, D)), ln1b=small(ks[9], (L, 1, D)),
        ln2g=1.0 + small(ks[10], (L, 1, D)), ln2b=small(ks[11], (L, 1, D)),
    )


# ---------------------------------------------------------------------------
# Pure-JAX reference (for correctness check only)
# ---------------------------------------------------------------------------
def ref_forward(H, params, pe, mask):
    hp = lax.Precision.HIGHEST

    def ln(x, g, b):
        mu = jnp.mean(x, axis=-1, keepdims=True)
        var = jnp.mean((x - mu) ** 2, axis=-1, keepdims=True)
        return (x - mu) / jnp.sqrt(var + EPS) * g + b

    x = (H + pe).reshape(B * T, D)
    for l in range(L):
        qkv = jnp.dot(x, params['wqkv'][l], precision=hp) + params['bqkv'][l]
        q = (qkv[:, :D] / math.sqrt(HD)).reshape(B, T, NH, HD).transpose(0, 2, 1, 3)
        k = qkv[:, D:2 * D].reshape(B, T, NH, HD).transpose(0, 2, 1, 3)
        v = qkv[:, 2 * D:].reshape(B, T, NH, HD).transpose(0, 2, 1, 3)
        s = jnp.einsum('bhqd,bhkd->bhqk', q, k, precision=hp) + mask
        p = jax.nn.softmax(s, axis=-1)
        a = jnp.einsum('bhqk,bhkd->bhqd', p, v, precision=hp)
        a = a.transpose(0, 2, 1, 3).reshape(B * T, D)
        a = jnp.dot(a, params['wo'][l], precision=hp) + params['bo'][l]
        x = ln(x + a, params['ln1g'][l], params['ln1b'][l])
        f = jax.nn.relu(jnp.dot(x, params['wff1'][l], precision=hp) + params['bff1'][l])
        f = jnp.dot(f, params['wff2'][l], precision=hp) + params['bff2'][l]
        x = ln(x + f, params['ln2g'][l], params['ln2b'][l])
    return x.reshape(B, T, D)


if __name__ == "__main__":
    key = jax.random.PRNGKey(0)
    kp, kx = jax.random.split(key)
    params = init_params(kp)

    # input H: (batch, seq, input_dim), batch_first=True like the PyTorch module
    H = jax.random.normal(kx, (B, T, D), dtype=jnp.float32)

    # module buffers, sliced to the runtime sequence length t=T (as in forward())
    pe = positional_encoding(MAX_LEN, D)[:, :T, :]     # (1, T, D)
    mask = causal_mask(MAX_LEN)[:T, :T]                # (T, T)

    y = jax.block_until_ready(sequence_encoder_forward(H, params, pe, mask))
    y_ref = jax.block_until_ready(ref_forward(H, params, pe, mask))

    assert y.shape == (B, T, D), y.shape
    max_err = float(jnp.max(jnp.abs(y - y_ref)))
    assert jnp.allclose(y, y_ref, rtol=1e-3, atol=1e-3), max_err
    print("KERNEL_OK")
</pallas_src>

<mosaic_0001>
module attributes {stable_mosaic.version = 11 : i64} {
  func.func @_encoder_kernel(%arg0: memref<2x8x32xf32, #tpu.memory_space<vmem>>, %arg1: memref<1x8x32xf32, #tpu.memory_space<vmem>>, %arg2: memref<8x8xf32, #tpu.memory_space<vmem>>, %arg3: memref<2x32x96xf32, #tpu.memory_space<vmem>>, %arg4: memref<2x1x96xf32, #tpu.memory_space<vmem>>, %arg5: memref<2x32x32xf32, #tpu.memory_space<vmem>>, %arg6: memref<2x1x32xf32, #tpu.memory_space<vmem>>, %arg7: memref<2x1x32xf32, #tpu.memory_space<vmem>>, %arg8: memref<2x1x32xf32, #tpu.memory_space<vmem>>, %arg9: memref<2x32x64xf32, #tpu.memory_space<vmem>>, %arg10: memref<2x1x64xf32, #tpu.memory_space<vmem>>, %arg11: memref<2x64x32xf32, #tpu.memory_space<vmem>>, %arg12: memref<2x1x32xf32, #tpu.memory_space<vmem>>, %arg13: memref<2x1x32xf32, #tpu.memory_space<vmem>>, %arg14: memref<2x1x32xf32, #tpu.memory_space<vmem>>, %arg15: memref<2x8x32xf32, #tpu.memory_space<vmem>>) attributes {dimension_semantics = [], scalar_prefetch = 0 : i64, scratch_operands = 0 : i64, tpu.core_type = #tpu.core_type<tc>} {
    %c0 = arith.constant 0 : index
    %c0_0 = arith.constant 0 : index
    %c0_1 = arith.constant 0 : index
    %0 = vector.load %arg0[%c0, %c0_0, %c0_1] : memref<2x8x32xf32, #tpu.memory_space<vmem>>, vector<2x8x32xf32>
    %c0_2 = arith.constant 0 : index
    %c0_3 = arith.constant 0 : index
    %c0_4 = arith.constant 0 : index
    %1 = vector.load %arg1[%c0_2, %c0_3, %c0_4] : memref<1x8x32xf32, #tpu.memory_space<vmem>>, vector<1x8x32xf32>
    %2 = vector.broadcast %1 : vector<1x8x32xf32> to vector<2x8x32xf32>
    %3 = arith.addf %0, %2 : vector<2x8x32xf32>
    %c0_5 = arith.constant 0 : index
    %c0_6 = arith.constant 0 : index
    %4 = vector.load %arg2[%c0_5, %c0_6] : memref<8x8xf32, #tpu.memory_space<vmem>>, vector<8x8xf32>
    %5 = vector.shape_cast %3 : vector<2x8x32xf32> to vector<16x32xf32>
    %c0_7 = arith.constant 0 : index
    %c0_8 = arith.constant 0 : index
    %c0_9 = arith.constant 0 : index
    %6 = vector.load %arg3[%c0_7, %c0_8, %c0_9] : memref<2x32x96xf32, #tpu.memory_space<vmem>>, vector<1x32x96xf32>
    %7 = vector.shape_cast %6 : vector<1x32x96xf32> to vector<32x96xf32>
    %cst = arith.constant dense<0.000000e+00> : vector<16x96xf32>
    %8 = tpu.matmul %5, %7, %cst {dimension_numbers = #tpu.dot_dimension_numbers<[1], [0], [0], [1], [0, 0, 1, 1], [], []>} : vector<16x32xf32>, vector<32x96xf32>, vector<16x96xf32> -> vector<16x96xf32>
    %c0_10 = arith.constant 0 : index
    %c0_11 = arith.constant 0 : index
    %c0_12 = arith.constant 0 : index
    %9 = vector.load %arg4[%c0_10, %c0_11, %c0_12] : memref<2x1x96xf32, #tpu.memory_space<vmem>>, vector<1x1x96xf32>
    %10 = vector.shape_cast %9 : vector<1x1x96xf32> to vector<1x96xf32>
    %11 = vector.broadcast %10 : vector<1x96xf32> to vector<16x96xf32>
    %12 = arith.addf %8, %11 : vector<16x96xf32>
    %13 = vector.extract_strided_slice %12 {offsets = [0, 0], sizes = [16, 32], strides = [1, 1]} : vector<16x96xf32> to vector<16x32xf32>
    %cst_13 = arith.constant 0.353553385 : f32
    %14 = vector.broadcast %cst_13 : f32 to vector<16x32xf32>
    %15 = arith.mulf %13, %14 : vector<16x32xf32>
    %16 = vector.shape_cast %15 : vector<16x32xf32> to vector<2x8x32xf32>
    %17 = vector.extract_strided_slice %12 {offsets = [0, 32], sizes = [16, 32], strides = [1, 1]} : vector<16x96xf32> to vector<16x32xf32>
    %18 = vector.shape_cast %17 : vector<16x32xf32> to vector<2x8x32xf32>
    %19 = vector.extract_strided_slice %12 {offsets = [0, 64], sizes = [16, 32], strides = [1, 1]} : vector<16x96xf32> to vector<16x32xf32>
    %20 = vector.shape_cast %19 : vector<16x32xf32> to vector<2x8x32xf32>
    %21 = vector.extract_strided_slice %16 {offsets = [0, 0, 0], sizes = [2, 8, 8], strides = [1, 1, 1]} : vector<2x8x32xf32> to vector<2x8x8xf32>
    %22 = vector.extract_strided_slice %18 {offsets = [0, 0, 0], sizes = [2, 8, 8], strides = [1, 1, 1]} : vector<2x8x32xf32> to vector<2x8x8xf32>
    "tpu.trace_start"() <{level = 10 : i32, message = "bqd,bkd->bqk"}> : () -> ()
    %cst_14 = arith.constant dense<0.000000e+00> : vector<2x8x8xf32>
    %23 = tpu.matmul %21, %22, %cst_14 {dimension_numbers = #tpu.dot_dimension_numbers<[2], [2], [1], [1], [0, 0, 0, 1, 1, 1], [0], [0]>} : vector<2x8x8xf32>, vector<2x8x8xf32>, vector<2x8x8xf32> -> vector<2x8x8xf32>
    "tpu.trace_stop"() : () -> ()
    %24 = vector.shape_cast %4 : vector<8x8xf32> to vector<1x8x8xf32>
    %25 = vector.broadcast %24 : vector<1x8x8xf32> to vector<2x8x8xf32>
    %26 = arith.addf %23, %25 : vector<2x8x8xf32>
    %cst_15 = arith.constant dense<0xFF800000> : vector<2x8xf32>
    %27 = vector.multi_reduction <maximumf>, %26, %cst_15 [2] : vector<2x8x8xf32> to vector<2x8xf32>
    %28 = vector.shape_cast %27 : vector<2x8xf32> to vector<2x8x1xf32>
    %29 = vector.broadcast %28 : vector<2x8x1xf32> to vector<2x8x8xf32>
    %30 = arith.subf %26, %29 : vector<2x8x8xf32>
    %31 = math.exp %30 : vector<2x8x8xf32>
    %cst_16 = arith.constant dense<0.000000e+00> : vector<2x8xf32>
    %32 = vector.multi_reduction <add>, %31, %cst_16 [2] : vector<2x8x8xf32> to vector<2x8xf32>
    %33 = vector.shape_cast %32 : vector<2x8xf32> to vector<2x8x1xf32>
    %34 = vector.broadcast %33 : vector<2x8x1xf32> to vector<2x8x8xf32>
    %35 = arith.divf %31, %34 : vector<2x8x8xf32>
    %36 = vector.extract_strided_slice %20 {offsets = [0, 0, 0], sizes = [2, 8, 8], strides = [1, 1, 1]} : vector<2x8x32xf32> to vector<2x8x8xf32>
    "tpu.trace_start"() <{level = 10 : i32, message = "bqk,bkd->bqd"}> : () -> ()
    %cst_17 = arith.constant dense<0.000000e+00> : vector<2x8x8xf32>
    %37 = tpu.matmul %35, %36, %cst_17 {dimension_numbers = #tpu.dot_dimension_numbers<[2], [1], [1], [2], [0, 0, 0, 1, 1, 2], [0], [0]>} : vector<2x8x8xf32>, vector<2x8x8xf32>, vector<2x8x8xf32> -> vector<2x8x8xf32>
    "tpu.trace_stop"() : () -> ()
    %38 = vector.extract_strided_slice %16 {offsets = [0, 0, 8], sizes = [2, 8, 8], strides = [1, 1, 1]} : vector<2x8x32xf32> to vector<2x8x8xf32>
    %39 = vector.extract_strided_slice %18 {offsets = [0, 0, 8], sizes = [2, 8, 8], strides = [1, 1, 1]} : vector<2x8x32xf32> to vector<2x8x8xf32>
    "tpu.trace_start"() <{level = 10 : i32, message = "bqd,bkd->bqk"}> : () -> ()
    %cst_18 = arith.constant dense<0.000000e+00> : vector<2x8x8xf32>
    %40 = tpu.matmul %38, %39, %cst_18 {dimension_numbers = #tpu.dot_dimension_numbers<[2], [2], [1], [1], [0, 0, 0, 1, 1, 1], [0], [0]>} : vector<2x8x8xf32>, vector<2x8x8xf32>, vector<2x8x8xf32> -> vector<2x8x8xf32>
    "tpu.trace_stop"() : () -> ()
    %41 = vector.shape_cast %4 : vector<8x8xf32> to vector<1x8x8xf32>
    %42 = vector.broadcast %41 : vector<1x8x8xf32> to vector<2x8x8xf32>
    %43 = arith.addf %40, %42 : vector<2x8x8xf32>
    %cst_19 = arith.constant dense<0xFF800000> : vector<2x8xf32>
    %44 = vector.multi_reduction <maximumf>, %43, %cst_19 [2] : vector<2x8x8xf32> to vector<2x8xf32>
    %45 = vector.shape_cast %44 : vector<2x8xf32> to vector<2x8x1xf32>
    %46 = vector.broadcast %45 : vector<2x8x1xf32> to vector<2x8x8xf32>
    %47 = arith.subf %43, %46 : vector<2x8x8xf32>
    %48 = math.exp %47 : vector<2x8x8xf32>
    %cst_20 = arith.constant dense<0.000000e+00> : vector<2x8xf32>
    %49 = vector.multi_reduction <add>, %48, %cst_20 [2] : vector<2x8x8xf32> to vector<2x8xf32>
    %50 = vector.shape_cast %49 : vector<2x8xf32> to vector<2x8x1xf32>
    %51 = vector.broadcast %50 : vector<2x8x1xf32> to vector<2x8x8xf32>
    %52 = arith.divf %48, %51 : vector<2x8x8xf32>
    %53 = vector.extract_strided_slice %20 {offsets = [0, 0, 8], sizes = [2, 8, 8], strides = [1, 1, 1]} : vector<2x8x32xf32> to vector<2x8x8xf32>
    "tpu.trace_start"() <{level = 10 : i32, message = "bqk,bkd->bqd"}> : () -> ()
    %cst_21 = arith.constant dense<0.000000e+00> : vector<2x8x8xf32>
    %54 = tpu.matmul %52, %53, %cst_21 {dimension_numbers = #tpu.dot_dimension_numbers<[2], [1], [1], [2], [0, 0, 0, 1, 1, 2], [0], [0]>} : vector<2x8x8xf32>, vector<2x8x8xf32>, vector<2x8x8xf32> -> vector<2x8x8xf32>
    "tpu.trace_stop"() : () -> ()
    %55 = vector.extract_strided_slice %16 {offsets = [0, 0, 16], sizes = [2, 8, 8], strides = [1, 1, 1]} : vector<2x8x32xf32> to vector<2x8x8xf32>
    %56 = vector.extract_strided_slice %18 {offsets = [0, 0, 16], sizes = [2, 8, 8], strides = [1, 1, 1]} : vector<2x8x32xf32> to vector<2x8x8xf32>
    "tpu.trace_start"() <{level = 10 : i32, message = "bqd,bkd->bqk"}> : () -> ()
    %cst_22 = arith.constant dense<0.000000e+00> : vector<2x8x8xf32>
    %57 = tpu.matmul %55, %56, %cst_22 {dimension_numbers = #tpu.dot_dimension_numbers<[2], [2], [1], [1], [0, 0, 0, 1, 1, 1], [0], [0]>} : vector<2x8x8xf32>, vector<2x8x8xf32>, vector<2x8x8xf32> -> vector<2x8x8xf32>
    "tpu.trace_stop"() : () -> ()
    %58 = vector.shape_cast %4 : vector<8x8xf32> to vector<1x8x8xf32>
    %59 = vector.broadcast %58 : vector<1x8x8xf32> to vector<2x8x8xf32>
    %60 = arith.addf %57, %59 : vector<2x8x8xf32>
    %cst_23 = arith.constant dense<0xFF800000> : vector<2x8xf32>
    %61 = vector.multi_reduction <maximumf>, %60, %cst_23 [2] : vector<2x8x8xf32> to vector<2x8xf32>
    %62 = vector.shape_cast %61 : vector<2x8xf32> to vector<2x8x1xf32>
    %63 = vector.broadcast %62 : vector<2x8x1xf32> to vector<2x8x8xf32>
    %64 = arith.subf %60, %63 : vector<2x8x8xf32>
    %65 = math.exp %64 : vector<2x8x8xf32>
    %cst_24 = arith.constant dense<0.000000e+00> : vector<2x8xf32>
    %66 = vector.multi_reduction <add>, %65, %cst_24 [2] : vector<2x8x8xf32> to vector<2x8xf32>
    %67 = vector.shape_cast %66 : vector<2x8xf32> to vector<2x8x1xf32>
    %68 = vector.broadcast %67 : vector<2x8x1xf32> to vector<2x8x8xf32>
    %69 = arith.divf %65, %68 : vector<2x8x8xf32>
    %70 = vector.extract_strided_slice %20 {offsets = [0, 0, 16], sizes = [2, 8, 8], strides = [1, 1, 1]} : vector<2x8x32xf32> to vector<2x8x8xf32>
    "tpu.trace_start"() <{level = 10 : i32, message = "bqk,bkd->bqd"}> : () -> ()
    %cst_25 = arith.constant dense<0.000000e+00> : vector<2x8x8xf32>
    %71 = tpu.matmul %69, %70, %cst_25 {dimension_numbers = #tpu.dot_dimension_numbers<[2], [1], [1], [2], [0, 0, 0, 1, 1, 2], [0], [0]>} : vector<2x8x8xf32>, vector<2x8x8xf32>, vector<2x8x8xf32> -> vector<2x8x8xf32>
    "tpu.trace_stop"() : () -> ()
    %72 = vector.extract_strided_slice %16 {offsets = [0, 0, 24], sizes = [2, 8, 8], strides = [1, 1, 1]} : vector<2x8x32xf32> to vector<2x8x8xf32>
    %73 = vector.extract_strided_slice %18 {offsets = [0, 0, 24], sizes = [2, 8, 8], strides = [1, 1, 1]} : vector<2x8x32xf32> to vector<2x8x8xf32>
    "tpu.trace_start"() <{level = 10 : i32, message = "bqd,bkd->bqk"}> : () -> ()
    %cst_26 = arith.constant dense<0.000000e+00> : vector<2x8x8xf32>
    %74 = tpu.matmul %72, %73, %cst_26 {dimension_numbers = #tpu.dot_dimension_numbers<[2], [2], [1], [1], [0, 0, 0, 1, 1, 1], [0], [0]>} : vector<2x8x8xf32>, vector<2x8x8xf32>, vector<2x8x8xf32> -> vector<2x8x8xf32>
    "tpu.trace_stop"() : () -> ()
    %75 = vector.shape_cast %4 : vector<8x8xf32> to vector<1x8x8xf32>
    %76 = vector.broadcast %75 : vector<1x8x8xf32> to vector<2x8x8xf32>
    %77 = arith.addf %74, %76 : vector<2x8x8xf32>
    %cst_27 = arith.constant dense<0xFF800000> : vector<2x8xf32>
    %78 = vector.multi_reduction <maximumf>, %77, %cst_27 [2] : vector<2x8x8xf32> to vector<2x8xf32>
    %79 = vector.shape_cast %78 : vector<2x8xf32> to vector<2x8x1xf32>
    %80 = vector.broadcast %79 : vector<2x8x1xf32> to vector<2x8x8xf32>
    %81 = arith.subf %77, %80 : vector<2x8x8xf32>
    %82 = math.exp %81 : vector<2x8x8xf32>
    %cst_28 = arith.constant dense<0.000000e+00> : vector<2x8xf32>
    %83 = vector.multi_reduction <add>, %82, %cst_28 [2] : vector<2x8x8xf32> to vector<2x8xf32>
    %84 = vector.shape_cast %83 : vector<2x8xf32> to vector<2x8x1xf32>
    %85 = vector.broadcast %84 : vector<2x8x1xf32> to vector<2x8x8xf32>
    %86 = arith.divf %82, %85 : vector<2x8x8xf32>
    %87 = vector.extract_strided_slice %20 {offsets = [0, 0, 24], sizes = [2, 8, 8], strides = [1, 1, 1]} : vector<2x8x32xf32> to vector<2x8x8xf32>
    "tpu.trace_start"() <{level = 10 : i32, message = "bqk,bkd->bqd"}> : () -> ()
    %cst_29 = arith.constant dense<0.000000e+00> : vector<2x8x8xf32>
    %88 = tpu.matmul %86, %87, %cst_29 {dimension_numbers = #tpu.dot_dimension_numbers<[2], [1], [1], [2], [0, 0, 0, 1, 1, 2], [0], [0]>} : vector<2x8x8xf32>, vector<2x8x8xf32>, vector<2x8x8xf32> -> vector<2x8x8xf32>
    "tpu.trace_stop"() : () -> ()
    %89 = tpu.concatenate %37, %54, %71, %88 in 2 : vector<2x8x8xf32>, vector<2x8x8xf32>, vector<2x8x8xf32>, vector<2x8x8xf32> -> vector<2x8x32xf32>
    %90 = vector.shape_cast %89 : vector<2x8x32xf32> to vector<16x32xf32>
    %c0_30 = arith.constant 0 : index
    %c0_31 = arith.constant 0 : index
    %c0_32 = arith.constant 0 : index
    %91 = vector.load %arg5[%c0_30, %c0_31, %c0_32] : memref<2x32x32xf32, #tpu.memory_space<vmem>>, vector<1x32x32xf32>
    %92 = vector.shape_cast %91 : vector<1x32x32xf32> to vector<32x32xf32>
    %cst_33 = arith.constant dense<0.000000e+00> : vector<16x32xf32>
    %93 = tpu.matmul %90, %92, %cst_33 {dimension_numbers = #tpu.dot_dimension_numbers<[1], [0], [0], [1], [0, 0, 1, 1], [], []>} : vector<16x32xf32>, vector<32x32xf32>, vector<16x32xf32> -> vector<16x32xf32>
    %c0_34 = arith.constant 0 : index
    %c0_35 = arith.constant 0 : index
    %c0_36 = arith.constant 0 : index
    %94 = vector.load %arg6[%c0_34, %c0_35, %c0_36] : memref<2x1x32xf32, #tpu.memory_space<vmem>>, vector<1x1x32xf32>
    %95 = vector.shape_cast %94 : vector<1x1x32xf32> to vector<1x32xf32>
    %96 = vector.broadcast %95 : vector<1x32xf32> to vector<16x32xf32>
    %97 = arith.addf %93, %96 : vector<16x32xf32>
    %98 = arith.addf %5, %97 : vector<16x32xf32>
    %c0_37 = arith.constant 0 : index
    %c0_38 = arith.constant 0 : index
    %c0_39 = arith.constant 0 : index
    %99 = vector.load %arg7[%c0_37, %c0_38, %c0_39] : memref<2x1x32xf32, #tpu.memory_space<vmem>>, vector<1x1x32xf32>
    %100 = vector.shape_cast %99 : vector<1x1x32xf32> to vector<1x32xf32>
    %c0_40 = arith.constant 0 : index
    %c0_41 = arith.constant 0 : index
    %c0_42 = arith.constant 0 : index
    %101 = vector.load %arg8[%c0_40, %c0_41, %c0_42] : memref<2x1x32xf32, #tpu.memory_space<vmem>>, vector<1x1x32xf32>
    %102 = vector.shape_cast %101 : vector<1x1x32xf32> to vector<1x32xf32>
    %cst_43 = arith.constant dense<0.000000e+00> : vector<16xf32>
    %103 = vector.multi_reduction <add>, %98, %cst_43 [1] : vector<16x32xf32> to vector<16xf32>
    %104 = vector.shape_cast %103 : vector<16xf32> to vector<16x1xf32>
    %cst_44 = arith.constant 3.200000e+01 : f32
    %105 = vector.broadcast %cst_44 : f32 to vector<16x1xf32>
    %106 = arith.divf %104, %105 : vector<16x1xf32>
    %107 = vector.broadcast %106 : vector<16x1xf32> to vector<16x32xf32>
    %108 = arith.subf %98, %107 : vector<16x32xf32>
    %109 = arith.mulf %108, %108 : vector<16x32xf32>
    %cst_45 = arith.constant dense<0.000000e+00> : vector<16xf32>
    %110 = vector.multi_reduction <add>, %109, %cst_45 [1] : vector<16x32xf32> to vector<16xf32>
    %111 = vector.shape_cast %110 : vector<16xf32> to vector<16x1xf32>
    %cst_46 = arith.constant 3.200000e+01 : f32
    %112 = vector.broadcast %cst_46 : f32 to vector<16x1xf32>
    %113 = arith.divf %111, %112 : vector<16x1xf32>
    %cst_47 = arith.constant 9.99999974E-6 : f32
    %114 = vector.broadcast %cst_47 : f32 to vector<16x1xf32>
    %115 = arith.addf %113, %114 : vector<16x1xf32>
    %116 = math.rsqrt %115 : vector<16x1xf32>
    %117 = vector.broadcast %116 : vector<16x1xf32> to vector<16x32xf32>
    %118 = arith.mulf %108, %117 : vector<16x32xf32>
    %119 = vector.broadcast %100 : vector<1x32xf32> to vector<16x32xf32>
    %120 = arith.mulf %118, %119 : vector<16x32xf32>
    %121 = vector.broadcast %102 : vector<1x32xf32> to vector<16x32xf32>
    %122 = arith.addf %120, %121 : vector<16x32xf32>
    %c0_48 = arith.constant 0 : index
    %c0_49 = arith.constant 0 : index
    %c0_50 = arith.constant 0 : index
    %123 = vector.load %arg9[%c0_48, %c0_49, %c0_50] : memref<2x32x64xf32, #tpu.memory_space<vmem>>, vector<1x32x64xf32>
    %124 = vector.shape_cast %123 : vector<1x32x64xf32> to vector<32x64xf32>
    %cst_51 = arith.constant dense<0.000000e+00> : vector<16x64xf32>
    %125 = tpu.matmul %122, %124, %cst_51 {dimension_numbers = #tpu.dot_dimension_numbers<[1], [0], [0], [1], [0, 0, 1, 1], [], []>} : vector<16x32xf32>, vector<32x64xf32>, vector<16x64xf32> -> vector<16x64xf32>
    %c0_52 = arith.constant 0 : index
    %c0_53 = arith.constant 0 : index
    %c0_54 = arith.constant 0 : index
    %126 = vector.load %arg10[%c0_52, %c0_53, %c0_54] : memref<2x1x64xf32, #tpu.memory_space<vmem>>, vector<1x1x64xf32>
    %127 = vector.shape_cast %126 : vector<1x1x64xf32> to vector<1x64xf32>
    %128 = vector.broadcast %127 : vector<1x64xf32> to vector<16x64xf32>
    %129 = arith.addf %125, %128 : vector<16x64xf32>
    %cst_55 = arith.constant 0.000000e+00 : f32
    %130 = vector.broadcast %cst_55 : f32 to vector<16x64xf32>
    %131 = arith.maximumf %129, %130 : vector<16x64xf32>
    %c0_56 = arith.constant 0 : index
    %c0_57 = arith.constant 0 : index
    %c0_58 = arith.constant 0 : index
    %132 = vector.load %arg11[%c0_56, %c0_57, %c0_58] : memref<2x64x32xf32, #tpu.memory_space<vmem>>, vector<1x64x32xf32>
    %133 = vector.shape_cast %132 : vector<1x64x32xf32> to vector<64x32xf32>
    %cst_59 = arith.constant dense<0.000000e+00> : vector<16x32xf32>
    %134 = tpu.matmul %131, %133, %cst_59 {dimension_numbers = #tpu.dot_dimension_numbers<[1], [0], [0], [1], [0, 0, 1, 1], [], []>} : vector<16x64xf32>, vector<64x32xf32>, vector<16x32xf32> -> vector<16x32xf32>
    %c0_60 = arith.constant 0 : index
    %c0_61 = arith.constant 0 : index
    %c0_62 = arith.constant 0 : index
    %135 = vector.load %arg12[%c0_60, %c0_61, %c0_62] : memref<2x1x32xf32, #tpu.memory_space<vmem>>, vector<1x1x32xf32>
    %136 = vector.shape_cast %135 : vector<1x1x32xf32> to vector<1x32xf32>
    %137 = vector.broadcast %136 : vector<1x32xf32> to vector<16x32xf32>
    %138 = arith.addf %134, %137 : vector<16x32xf32>
    %139 = arith.addf %122, %138 : vector<16x32xf32>
    %c0_63 = arith.constant 0 : index
    %c0_64 = arith.constant 0 : index
    %c0_65 = arith.constant 0 : index
    %140 = vector.load %arg13[%c0_63, %c0_64, %c0_65] : memref<2x1x32xf32, #tpu.memory_space<vmem>>, vector<1x1x32xf32>
    %141 = vector.shape_cast %140 : vector<1x1x32xf32> to vector<1x32xf32>
    %c0_66 = arith.constant 0 : index
    %c0_67 = arith.constant 0 : index
    %c0_68 = arith.constant 0 : index
    %142 = vector.load %arg14[%c0_66, %c0_67, %c0_68] : memref<2x1x32xf32, #tpu.memory_space<vmem>>, vector<1x1x32xf32>
    %143 = vector.shape_cast %142 : vector<1x1x32xf32> to vector<1x32xf32>
    %cst_69 = arith.constant dense<0.000000e+00> : vector<16xf32>
    %144 = vector.multi_reduction <add>, %139, %cst_69 [1] : vector<16x32xf32> to vector<16xf32>
    %145 = vector.shape_cast %144 : vector<16xf32> to vector<16x1xf32>
    %cst_70 = arith.constant 3.200000e+01 : f32
    %146 = vector.broadcast %cst_70 : f32 to vector<16x1xf32>
    %147 = arith.divf %145, %146 : vector<16x1xf32>
    %148 = vector.broadcast %147 : vector<16x1xf32> to vector<16x32xf32>
    %149 = arith.subf %139, %148 : vector<16x32xf32>
    %150 = arith.mulf %149, %149 : vector<16x32xf32>
    %cst_71 = arith.constant dense<0.000000e+00> : vector<16xf32>
    %151 = vector.multi_reduction <add>, %150, %cst_71 [1] : vector<16x32xf32> to vector<16xf32>
    %152 = vector.shape_cast %151 : vector<16xf32> to vector<16x1xf32>
    %cst_72 = arith.constant 3.200000e+01 : f32
    %153 = vector.broadcast %cst_72 : f32 to vector<16x1xf32>
    %154 = arith.divf %152, %153 : vector<16x1xf32>
    %cst_73 = arith.constant 9.99999974E-6 : f32
    %155 = vector.broadcast %cst_73 : f32 to vector<16x1xf32>
    %156 = arith.addf %154, %155 : vector<16x1xf32>
    %157 = math.rsqrt %156 : vector<16x1xf32>
    %158 = vector.broadcast %157 : vector<16x1xf32> to vector<16x32xf32>
    %159 = arith.mulf %149, %158 : vector<16x32xf32>
    %160 = vector.broadcast %141 : vector<1x32xf32> to vector<16x32xf32>
    %161 = arith.mulf %159, %160 : vector<16x32xf32>
    %162 = vector.broadcast %143 : vector<1x32xf32> to vector<16x32xf32>
    %163 = arith.addf %161, %162 : vector<16x32xf32>
    %c1 = arith.constant 1 : index
    %c0_74 = arith.constant 0 : index
    %c0_75 = arith.constant 0 : index
    %164 = vector.load %arg3[%c1, %c0_74, %c0_75] : memref<2x32x96xf32, #tpu.memory_space<vmem>>, vector<1x32x96xf32>
    %165 = vector.shape_cast %164 : vector<1x32x96xf32> to vector<32x96xf32>
    %cst_76 = arith.constant dense<0.000000e+00> : vector<16x96xf32>
    %166 = tpu.matmul %163, %165, %cst_76 {dimension_numbers = #tpu.dot_dimension_numbers<[1], [0], [0], [1], [0, 0, 1, 1], [], []>} : vector<16x32xf32>, vector<32x96xf32>, vector<16x96xf32> -> vector<16x96xf32>
    %c1_77 = arith.constant 1 : index
    %c0_78 = arith.constant 0 : index
    %c0_79 = arith.constant 0 : index
    %167 = vector.load %arg4[%c1_77, %c0_78, %c0_79] : memref<2x1x96xf32, #tpu.memory_space<vmem>>, vector<1x1x96xf32>
    %168 = vector.shape_cast %167 : vector<1x1x96xf32> to vector<1x96xf32>
    %169 = vector.broadcast %168 : vector<1x96xf32> to vector<16x96xf32>
    %170 = arith.addf %166, %169 : vector<16x96xf32>
    %171 = vector.extract_strided_slice %170 {offsets = [0, 0], sizes = [16, 32], strides = [1, 1]} : vector<16x96xf32> to vector<16x32xf32>
    %cst_80 = arith.constant 0.353553385 : f32
    %172 = vector.broadcast %cst_80 : f32 to vector<16x32xf32>
    %173 = arith.mulf %171, %172 : vector<16x32xf32>
    %174 = vector.shape_cast %173 : vector<16x32xf32> to vector<2x8x32xf32>
    %175 = vector.extract_strided_slice %170 {offsets = [0, 32], sizes = [16, 32], strides = [1, 1]} : vector<16x96xf32> to vector<16x32xf32>
    %176 = vector.shape_cast %175 : vector<16x32xf32> to vector<2x8x32xf32>
    %177 = vector.extract_strided_slice %170 {offsets = [0, 64], sizes = [16, 32], strides = [1, 1]} : vector<16x96xf32> to vector<16x32xf32>
    %178 = vector.shape_cast %177 : vector<16x32xf32> to vector<2x8x32xf32>
    %179 = vector.extract_strided_slice %174 {offsets = [0, 0, 0], sizes = [2, 8, 8], strides = [1, 1, 1]} : vector<2x8x32xf32> to vector<2x8x8xf32>
    %180 = vector.extract_strided_slice %176 {offsets = [0, 0, 0], sizes = [2, 8, 8], strides = [1, 1, 1]} : vector<2x8x32xf32> to vector<2x8x8xf32>
    "tpu.trace_start"() <{level = 10 : i32, message = "bqd,bkd->bqk"}> : () -> ()
    %cst_81 = arith.constant dense<0.000000e+00> : vector<2x8x8xf32>
    %181 = tpu.matmul %179, %180, %cst_81 {dimension_numbers = #tpu.dot_dimension_numbers<[2], [2], [1], [1], [0, 0, 0, 1, 1, 1], [0], [0]>} : vector<2x8x8xf32>, vector<2x8x8xf32>, vector<2x8x8xf32> -> vector<2x8x8xf32>
    "tpu.trace_stop"() : () -> ()
    %182 = vector.shape_cast %4 : vector<8x8xf32> to vector<1x8x8xf32>
    %183 = vector.broadcast %182 : vector<1x8x8xf32> to vector<2x8x8xf32>
    %184 = arith.addf %181, %183 : vector<2x8x8xf32>
    %cst_82 = arith.constant dense<0xFF800000> : vector<2x8xf32>
    %185 = vector.multi_reduction <maximumf>, %184, %cst_82 [2] : vector<2x8x8xf32> to vector<2x8xf32>
    %186 = vector.shape_cast %185 : vector<2x8xf32> to vector<2x8x1xf32>
    %187 = vector.broadcast %186 : vector<2x8x1xf32> to vector<2x8x8xf32>
    %188 = arith.subf %184, %187 : vector<2x8x8xf32>
    %189 = math.exp %188 : vector<2x8x8xf32>
    %cst_83 = arith.constant dense<0.000000e+00> : vector<2x8xf32>
    %190 = vector.multi_reduction <add>, %189, %cst_83 [2] : vector<2x8x8xf32> to vector<2x8xf32>
    %191 = vector.shape_cast %190 : vector<2x8xf32> to vector<2x8x1xf32>
    %192 = vector.broadcast %191 : vector<2x8x1xf32> to vector<2x8x8xf32>
    %193 = arith.divf %189, %192 : vector<2x8x8xf32>
    %194 = vector.extract_strided_slice %178 {offsets = [0, 0, 0], sizes = [2, 8, 8], strides = [1, 1, 1]} : vector<2x8x32xf32> to vector<2x8x8xf32>
    "tpu.trace_start"() <{level = 10 : i32, message = "bqk,bkd->bqd"}> : () -> ()
    %cst_84 = arith.constant dense<0.000000e+00> : vector<2x8x8xf32>
    %195 = tpu.matmul %193, %194, %cst_84 {dimension_numbers = #tpu.dot_dimension_numbers<[2], [1], [1], [2], [0, 0, 0, 1, 1, 2], [0], [0]>} : vector<2x8x8xf32>, vector<2x8x8xf32>, vector<2x8x8xf32> -> vector<2x8x8xf32>
    "tpu.trace_stop"() : () -> ()
    %196 = vector.extract_strided_slice %174 {offsets = [0, 0, 8], sizes = [2, 8, 8], strides = [1, 1, 1]} : vector<2x8x32xf32> to vector<2x8x8xf32>
    %197 = vector.extract_strided_slice %176 {offsets = [0, 0, 8], sizes = [2, 8, 8], strides = [1, 1, 1]} : vector<2x8x32xf32> to vector<2x8x8xf32>
    "tpu.trace_start"() <{level = 10 : i32, message = "bqd,bkd->bqk"}> : () -> ()
    %cst_85 = arith.constant dense<0.000000e+00> : vector<2x8x8xf32>
    %198 = tpu.matmul %196, %197, %cst_85 {dimension_numbers = #tpu.dot_dimension_numbers<[2], [2], [1], [1], [0, 0, 0, 1, 1, 1], [0], [0]>} : vector<2x8x8xf32>, vector<2x8x8xf32>, vector<2x8x8xf32> -> vector<2x8x8xf32>
    "tpu.trace_stop"() : () -> ()
    %199 = vector.shape_cast %4 : vector<8x8xf32> to vector<1x8x8xf32>
    %200 = vector.broadcast %199 : vector<1x8x8xf32> to vector<2x8x8xf32>
    %201 = arith.addf %198, %200 : vector<2x8x8xf32>
    %cst_86 = arith.constant dense<0xFF800000> : vector<2x8xf32>
    %202 = vector.multi_reduction <maximumf>, %201, %cst_86 [2] : vector<2x8x8xf32> to vector<2x8xf32>
    %203 = vector.shape_cast %202 : vector<2x8xf32> to vector<2x8x1xf32>
    %204 = vector.broadcast %203 : vector<2x8x1xf32> to vector<2x8x8xf32>
    %205 = arith.subf %201, %204 : vector<2x8x8xf32>
    %206 = math.exp %205 : vector<2x8x8xf32>
    %cst_87 = arith.constant dense<0.000000e+00> : vector<2x8xf32>
    %207 = vector.multi_reduction <add>, %206, %cst_87 [2] : vector<2x8x8xf32> to vector<2x8xf32>
    %208 = vector.shape_cast %207 : vector<2x8xf32> to vector<2x8x1xf32>
    %209 = vector.broadcast %208 : vector<2x8x1xf32> to vector<2x8x8xf32>
    %210 = arith.divf %206, %209 : vector<2x8x8xf32>
    %211 = vector.extract_strided_slice %178 {offsets = [0, 0, 8], sizes = [2, 8, 8], strides = [1, 1, 1]} : vector<2x8x32xf32> to vector<2x8x8xf32>
    "tpu.trace_start"() <{level = 10 : i32, message = "bqk,bkd->bqd"}> : () -> ()
    %cst_88 = arith.constant dense<0.000000e+00> : vector<2x8x8xf32>
    %212 = tpu.matmul %210, %211, %cst_88 {dimension_numbers = #tpu.dot_dimension_numbers<[2], [1], [1], [2], [0, 0, 0, 1, 1, 2], [0], [0]>} : vector<2x8x8xf32>, vector<2x8x8xf32>, vector<2x8x8xf32> -> vector<2x8x8xf32>
    "tpu.trace_stop"() : () -> ()
    %213 = vector.extract_strided_slice %174 {offsets = [0, 0, 16], sizes = [2, 8, 8], strides = [1, 1, 1]} : vector<2x8x32xf32> to vector<2x8x8xf32>
    %214 = vector.extract_strided_slice %176 {offsets = [0, 0, 16], sizes = [2, 8, 8], strides = [1, 1, 1]} : vector<2x8x32xf32> to vector<2x8x8xf32>
    "tpu.trace_start"() <{level = 10 : i32, message = "bqd,bkd->bqk"}> : () -> ()
    %cst_89 = arith.constant dense<0.000000e+00> : vector<2x8x8xf32>
    %215 = tpu.matmul %213, %214, %cst_89 {dimension_numbers = #tpu.dot_dimension_numbers<[2], [2], [1], [1], [0, 0, 0, 1, 1, 1], [0], [0]>} : vector<2x8x8xf32>, vector<2x8x8xf32>, vector<2x8x8xf32> -> vector<2x8x8xf32>
    "tpu.trace_stop"() : () -> ()
    %216 = vector.shape_cast %4 : vector<8x8xf32> to vector<1x8x8xf32>
    %217 = vector.broadcast %216 : vector<1x8x8xf32> to vector<2x8x8xf32>
    %218 = arith.addf %215, %217 : vector<2x8x8xf32>
    %cst_90 = arith.constant dense<0xFF800000> : vector<2x8xf32>
    %219 = vector.multi_reduction <maximumf>, %218, %cst_90 [2] : vector<2x8x8xf32> to vector<2x8xf32>
    %220 = vector.shape_cast %219 : vector<2x8xf32> to vector<2x8x1xf32>
    %221 = vector.broadcast %220 : vector<2x8x1xf32> to vector<2x8x8xf32>
    %222 = arith.subf %218, %221 : vector<2x8x8xf32>
    %223 = math.exp %222 : vector<2x8x8xf32>
    %cst_91 = arith.constant dense<0.000000e+00> : vector<2x8xf32>
    %224 = vector.multi_reduction <add>, %223, %cst_91 [2] : vector<2x8x8xf32> to vector<2x8xf32>
    %225 = vector.shape_cast %224 : vector<2x8xf32> to vector<2x8x1xf32>
    %226 = vector.broadcast %225 : vector<2x8x1xf32> to vector<2x8x8xf32>
    %227 = arith.divf %223, %226 : vector<2x8x8xf32>
    %228 = vector.extract_strided_slice %178 {offsets = [0, 0, 16], sizes = [2, 8, 8], strides = [1, 1, 1]} : vector<2x8x32xf32> to vector<2x8x8xf32>
    "tpu.trace_start"() <{level = 10 : i32, message = "bqk,bkd->bqd"}> : () -> ()
    %cst_92 = arith.constant dense<0.000000e+00> : vector<2x8x8xf32>
    %229 = tpu.matmul %227, %228, %cst_92 {dimension_numbers = #tpu.dot_dimension_numbers<[2], [1], [1], [2], [0, 0, 0, 1, 1, 2], [0], [0]>} : vector<2x8x8xf32>, vector<2x8x8xf32>, vector<2x8x8xf32> -> vector<2x8x8xf32>
    "tpu.trace_stop"() : () -> ()
    %230 = vector.extract_strided_slice %174 {offsets = [0, 0, 24], sizes = [2, 8, 8], strides = [1, 1, 1]} : vector<2x8x32xf32> to vector<2x8x8xf32>
    %231 = vector.extract_strided_slice %176 {offsets = [0, 0, 24], sizes = [2, 8, 8], strides = [1, 1, 1]} : vector<2x8x32xf32> to vector<2x8x8xf32>
    "tpu.trace_start"() <{level = 10 : i32, message = "bqd,bkd->bqk"}> : () -> ()
    %cst_93 = arith.constant dense<0.000000e+00> : vector<2x8x8xf32>
    %232 = tpu.matmul %230, %231, %cst_93 {dimension_numbers = #tpu.dot_dimension_numbers<[2], [2], [1], [1], [0, 0, 0, 1, 1, 1], [0], [0]>} : vector<2x8x8xf32>, vector<2x8x8xf32>, vector<2x8x8xf32> -> vector<2x8x8xf32>
    "tpu.trace_stop"() : () -> ()
    %233 = vector.shape_cast %4 : vector<8x8xf32> to vector<1x8x8xf32>
    %234 = vector.broadcast %233 : vector<1x8x8xf32> to vector<2x8x8xf32>
    %235 = arith.addf %232, %234 : vector<2x8x8xf32>
    %cst_94 = arith.constant dense<0xFF800000> : vector<2x8xf32>
    %236 = vector.multi_reduction <maximumf>, %235, %cst_94 [2] : vector<2x8x8xf32> to vector<2x8xf32>
    %237 = vector.shape_cast %236 : vector<2x8xf32> to vector<2x8x1xf32>
    %238 = vector.broadcast %237 : vector<2x8x1xf32> to vector<2x8x8xf32>
    %239 = arith.subf %235, %238 : vector<2x8x8xf32>
    %240 = math.exp %239 : vector<2x8x8xf32>
    %cst_95 = arith.constant dense<0.000000e+00> : vector<2x8xf32>
    %241 = vector.multi_reduction <add>, %240, %cst_95 [2] : vector<2x8x8xf32> to vector<2x8xf32>
    %242 = vector.shape_cast %241 : vector<2x8xf32> to vector<2x8x1xf32>
    %243 = vector.broadcast %242 : vector<2x8x1xf32> to vector<2x8x8xf32>
    %244 = arith.divf %240, %243 : vector<2x8x8xf32>
    %245 = vector.extract_strided_slice %178 {offsets = [0, 0, 24], sizes = [2, 8, 8], strides = [1, 1, 1]} : vector<2x8x32xf32> to vector<2x8x8xf32>
    "tpu.trace_start"() <{level = 10 : i32, message = "bqk,bkd->bqd"}> : () -> ()
    %cst_96 = arith.constant dense<0.000000e+00> : vector<2x8x8xf32>
    %246 = tpu.matmul %244, %245, %cst_96 {dimension_numbers = #tpu.dot_dimension_numbers<[2], [1], [1], [2], [0, 0, 0, 1, 1, 2], [0], [0]>} : vector<2x8x8xf32>, vector<2x8x8xf32>, vector<2x8x8xf32> -> vector<2x8x8xf32>
    "tpu.trace_stop"() : () -> ()
    %247 = tpu.concatenate %195, %212, %229, %246 in 2 : vector<2x8x8xf32>, vector<2x8x8xf32>, vector<2x8x8xf32>, vector<2x8x8xf32> -> vector<2x8x32xf32>
    %248 = vector.shape_cast %247 : vector<2x8x32xf32> to vector<16x32xf32>
    %c1_97 = arith.constant 1 : index
    %c0_98 = arith.constant 0 : index
    %c0_99 = arith.constant 0 : index
    %249 = vector.load %arg5[%c1_97, %c0_98, %c0_99] : memref<2x32x32xf32, #tpu.memory_space<vmem>>, vector<1x32x32xf32>
    %250 = vector.shape_cast %249 : vector<1x32x32xf32> to vector<32x32xf32>
    %cst_100 = arith.constant dense<0.000000e+00> : vector<16x32xf32>
    %251 = tpu.matmul %248, %250, %cst_100 {dimension_numbers = #tpu.dot_dimension_numbers<[1], [0], [0], [1], [0, 0, 1, 1], [], []>} : vector<16x32xf32>, vector<32x32xf32>, vector<16x32xf32> -> vector<16x32xf32>
    %c1_101 = arith.constant 1 : index
    %c0_102 = arith.constant 0 : index
    %c0_103 = arith.constant 0 : index
    %252 = vector.load %arg6[%c1_101, %c0_102, %c0_103] : memref<2x1x32xf32, #tpu.memory_space<vmem>>, vector<1x1x32xf32>
    %253 = vector.shape_cast %252 : vector<1x1x32xf32> to vector<1x32xf32>
    %254 = vector.broadcast %253 : vector<1x32xf32> to vector<16x32xf32>
    %255 = arith.addf %251, %254 : vector<16x32xf32>
    %256 = arith.addf %163, %255 : vector<16x32xf32>
    %c1_104 = arith.constant 1 : index
    %c0_105 = arith.constant 0 : index
    %c0_106 = arith.constant 0 : index
    %257 = vector.load %arg7[%c1_104, %c0_105, %c0_106] : memref<2x1x32xf32, #tpu.memory_space<vmem>>, vector<1x1x32xf32>
    %258 = vector.shape_cast %257 : vector<1x1x32xf32> to vector<1x32xf32>
    %c1_107 = arith.constant 1 : index
    %c0_108 = arith.constant 0 : index
    %c0_109 = arith.constant 0 : index
    %259 = vector.load %arg8[%c1_107, %c0_108, %c0_109] : memref<2x1x32xf32, #tpu.memory_space<vmem>>, vector<1x1x32xf32>
    %260 = vector.shape_cast %259 : vector<1x1x32xf32> to vector<1x32xf32>
    %cst_110 = arith.constant dense<0.000000e+00> : vector<16xf32>
    %261 = vector.multi_reduction <add>, %256, %cst_110 [1] : vector<16x32xf32> to vector<16xf32>
    %262 = vector.shape_cast %261 : vector<16xf32> to vector<16x1xf32>
    %cst_111 = arith.constant 3.200000e+01 : f32
    %263 = vector.broadcast %cst_111 : f32 to vector<16x1xf32>
    %264 = arith.divf %262, %263 : vector<16x1xf32>
    %265 = vector.broadcast %264 : vector<16x1xf32> to vector<16x32xf32>
    %266 = arith.subf %256, %265 : vector<16x32xf32>
    %267 = arith.mulf %266, %266 : vector<16x32xf32>
    %cst_112 = arith.constant dense<0.000000e+00> : vector<16xf32>
    %268 = vector.multi_reduction <add>, %267, %cst_112 [1] : vector<16x32xf32> to vector<16xf32>
    %269 = vector.shape_cast %268 : vector<16xf32> to vector<16x1xf32>
    %cst_113 = arith.constant 3.200000e+01 : f32
    %270 = vector.broadcast %cst_113 : f32 to vector<16x1xf32>
    %271 = arith.divf %269, %270 : vector<16x1xf32>
    %cst_114 = arith.constant 9.99999974E-6 : f32
    %272 = vector.broadcast %cst_114 : f32 to vector<16x1xf32>
    %273 = arith.addf %271, %272 : vector<16x1xf32>
    %274 = math.rsqrt %273 : vector<16x1xf32>
    %275 = vector.broadcast %274 : vector<16x1xf32> to vector<16x32xf32>
    %276 = arith.mulf %266, %275 : vector<16x32xf32>
    %277 = vector.broadcast %258 : vector<1x32xf32> to vector<16x32xf32>
    %278 = arith.mulf %276, %277 : vector<16x32xf32>
    %279 = vector.broadcast %260 : vector<1x32xf32> to vector<16x32xf32>
    %280 = arith.addf %278, %279 : vector<16x32xf32>
    %c1_115 = arith.constant 1 : index
    %c0_116 = arith.constant 0 : index
    %c0_117 = arith.constant 0 : index
    %281 = vector.load %arg9[%c1_115, %c0_116, %c0_117] : memref<2x32x64xf32, #tpu.memory_space<vmem>>, vector<1x32x64xf32>
    %282 = vector.shape_cast %281 : vector<1x32x64xf32> to vector<32x64xf32>
    %cst_118 = arith.constant dense<0.000000e+00> : vector<16x64xf32>
    %283 = tpu.matmul %280, %282, %cst_118 {dimension_numbers = #tpu.dot_dimension_numbers<[1], [0], [0], [1], [0, 0, 1, 1], [], []>} : vector<16x32xf32>, vector<32x64xf32>, vector<16x64xf32> -> vector<16x64xf32>
    %c1_119 = arith.constant 1 : index
    %c0_120 = arith.constant 0 : index
    %c0_121 = arith.constant 0 : index
    %284 = vector.load %arg10[%c1_119, %c0_120, %c0_121] : memref<2x1x64xf32, #tpu.memory_space<vmem>>, vector<1x1x64xf32>
    %285 = vector.shape_cast %284 : vector<1x1x64xf32> to vector<1x64xf32>
    %286 = vector.broadcast %285 : vector<1x64xf32> to vector<16x64xf32>
    %287 = arith.addf %283, %286 : vector<16x64xf32>
    %cst_122 = arith.constant 0.000000e+00 : f32
    %288 = vector.broadcast %cst_122 : f32 to vector<16x64xf32>
    %289 = arith.maximumf %287, %288 : vector<16x64xf32>
    %c1_123 = arith.constant 1 : index
    %c0_124 = arith.constant 0 : index
    %c0_125 = arith.constant 0 : index
    %290 = vector.load %arg11[%c1_123, %c0_124, %c0_125] : memref<2x64x32xf32, #tpu.memory_space<vmem>>, vector<1x64x32xf32>
    %291 = vector.shape_cast %290 : vector<1x64x32xf32> to vector<64x32xf32>
    %cst_126 = arith.constant dense<0.000000e+00> : vector<16x32xf32>
    %292 = tpu.matmul %289, %291, %cst_126 {dimension_numbers = #tpu.dot_dimension_numbers<[1], [0], [0], [1], [0, 0, 1, 1], [], []>} : vector<16x64xf32>, vector<64x32xf32>, vector<16x32xf32> -> vector<16x32xf32>
    %c1_127 = arith.constant 1 : index
    %c0_128 = arith.constant 0 : index
    %c0_129 = arith.constant 0 : index
    %293 = vector.load %arg12[%c1_127, %c0_128, %c0_129] : memref<2x1x32xf32, #tpu.memory_space<vmem>>, vector<1x1x32xf32>
    %294 = vector.shape_cast %293 : vector<1x1x32xf32> to vector<1x32xf32>
    %295 = vector.broadcast %294 : vector<1x32xf32> to vector<16x32xf32>
    %296 = arith.addf %292, %295 : vector<16x32xf32>
    %297 = arith.addf %280, %296 : vector<16x32xf32>
    %c1_130 = arith.constant 1 : index
    %c0_131 = arith.constant 0 : index
    %c0_132 = arith.constant 0 : index
    %298 = vector.load %arg13[%c1_130, %c0_131, %c0_132] : memref<2x1x32xf32, #tpu.memory_space<vmem>>, vector<1x1x32xf32>
    %299 = vector.shape_cast %298 : vector<1x1x32xf32> to vector<1x32xf32>
    %c1_133 = arith.constant 1 : index
    %c0_134 = arith.constant 0 : index
    %c0_135 = arith.constant 0 : index
    %300 = vector.load %arg14[%c1_133, %c0_134, %c0_135] : memref<2x1x32xf32, #tpu.memory_space<vmem>>, vector<1x1x32xf32>
    %301 = vector.shape_cast %300 : vector<1x1x32xf32> to vector<1x32xf32>
    %cst_136 = arith.constant dense<0.000000e+00> : vector<16xf32>
    %302 = vector.multi_reduction <add>, %297, %cst_136 [1] : vector<16x32xf32> to vector<16xf32>
    %303 = vector.shape_cast %302 : vector<16xf32> to vector<16x1xf32>
    %cst_137 = arith.constant 3.200000e+01 : f32
    %304 = vector.broadcast %cst_137 : f32 to vector<16x1xf32>
    %305 = arith.divf %303, %304 : vector<16x1xf32>
    %306 = vector.broadcast %305 : vector<16x1xf32> to vector<16x32xf32>
    %307 = arith.subf %297, %306 : vector<16x32xf32>
    %308 = arith.mulf %307, %307 : vector<16x32xf32>
    %cst_138 = arith.constant dense<0.000000e+00> : vector<16xf32>
    %309 = vector.multi_reduction <add>, %308, %cst_138 [1] : vector<16x32xf32> to vector<16xf32>
    %310 = vector.shape_cast %309 : vector<16xf32> to vector<16x1xf32>
    %cst_139 = arith.constant 3.200000e+01 : f32
    %311 = vector.broadcast %cst_139 : f32 to vector<16x1xf32>
    %312 = arith.divf %310, %311 : vector<16x1xf32>
    %cst_140 = arith.constant 9.99999974E-6 : f32
    %313 = vector.broadcast %cst_140 : f32 to vector<16x1xf32>
    %314 = arith.addf %312, %313 : vector<16x1xf32>
    %315 = math.rsqrt %314 : vector<16x1xf32>
    %316 = vector.broadcast %315 : vector<16x1xf32> to vector<16x32xf32>
    %317 = arith.mulf %307, %316 : vector<16x32xf32>
    %318 = vector.broadcast %299 : vector<1x32xf32> to vector<16x32xf32>
    %319 = arith.mulf %317, %318 : vector<16x32xf32>
    %320 = vector.broadcast %301 : vector<1x32xf32> to vector<16x32xf32>
    %321 = arith.addf %319, %320 : vector<16x32xf32>
    %322 = vector.shape_cast %321 : vector<16x32xf32> to vector<2x8x32xf32>
    %c0_141 = arith.constant 0 : index
    %c0_142 = arith.constant 0 : index
    %c0_143 = arith.constant 0 : index
    %323 = vector.load %arg15[%c0_141, %c0_142, %c0_143] : memref<2x8x32xf32, #tpu.memory_space<vmem>>, vector<2x8x32xf32>
    tpu.vector_store %arg15[%c0_141, %c0_142, %c0_143], %322 {strides = array<i32>} : memref<2x8x32xf32, #tpu.memory_space<vmem>>, vector<2x8x32xf32>,
    return
  }
}

</mosaic_0001>

<llo_original>
// kernel: sequence_encoder_forward.1
$region0: #{sequence_encoder_forward.1}
  #allocation0 [shape = 'u32[]', space=smem, size = 0x4, offset = 0x4, fixed_abs, tag = 'smem constant byte address 0x4 - core index']
  #allocation1 [shape = 'u32[72,128]{1,0:T(1,128)}', space=vmem, size = 0x9000, scoped, tag = 'internal scratch']
  %s0 = inlined_call_operand.hbm [shape: f32[2,8,32], index: 0, kind: input, shape index: {}]
  %s1 = inlined_call_operand.vmem [shape: f32[1,8,32], index: 1, kind: input, shape index: {}]
  %s2 = inlined_call_operand.hbm [shape: f32[8,8], index: 2, kind: input, shape index: {}]
  %s3 = inlined_call_operand.vmem [shape: f32[2,32,96], index: 3, kind: input, shape index: {}]
  %s4 = inlined_call_operand.hbm [shape: f32[2,1,96], index: 4, kind: input, shape index: {}]
  %s5 = inlined_call_operand.vmem [shape: f32[2,32,32], index: 5, kind: input, shape index: {}]
  %s6 = inlined_call_operand.hbm [shape: f32[2,1,32], index: 6, kind: input, shape index: {}]
  %s7 = inlined_call_operand.hbm [shape: f32[2,1,32], index: 7, kind: input, shape index: {}]
  %s8 = inlined_call_operand.hbm [shape: f32[2,1,32], index: 8, kind: input, shape index: {}]
  %s9 = inlined_call_operand.vmem [shape: f32[2,32,64], index: 9, kind: input, shape index: {}]
  %s10 = inlined_call_operand.hbm [shape: f32[2,1,64], index: 10, kind: input, shape index: {}]
  %s11 = inlined_call_operand.vmem [shape: f32[2,64,32], index: 11, kind: input, shape index: {}]
  %s12 = inlined_call_operand.hbm [shape: f32[2,1,32], index: 12, kind: input, shape index: {}]
  %s13 = inlined_call_operand.hbm [shape: f32[2,1,32], index: 13, kind: input, shape index: {}]
  %s14 = inlined_call_operand.hbm [shape: f32[2,1,32], index: 14, kind: input, shape index: {}]
  %s15 = inlined_call_operand.hbm [shape: f32[2,8,32], index: 15, kind: output, shape index: {}]
  %s16 = sld [smem:[#allocation0]]
  $region110: #{sequence_encoder_forward.1} parent=0
    _
  %s18 = ssub.s32 1, %s16
  %s19 = scalar_select 0, %s18, %s16
  $region1: #{sequence_encoder_forward.1} parent=0
    #allocation2 [shape = 'u8[8192]{0}', space=vmem, size = 0x2000, scoped, tag = 'input window, operand 0, single buffered']
    #allocation3 [shape = 's32[1]{0}', space=sflag, size = 0x4, scoped, tag = 'scoped memory for sequence_encoder_forward.1']
    #allocation4 [shape = 's32[1]{0}', space=sflag, size = 0x4, scoped, tag = 'scoped memory for sequence_encoder_forward.1']
    #allocation5 [shape = 'u8[4096]{0}', space=vmem, size = 0x1000, scoped, tag = 'input window, operand 2, single buffered']
    #allocation6 [shape = 's32[1]{0}', space=sflag, size = 0x4, scoped, tag = 'scoped memory for sequence_encoder_forward.1']
    #allocation7 [shape = 'u8[1024]{0}', space=vmem, size = 0x400, scoped, tag = 'input window, operand 4, single buffered']
    #allocation8 [shape = 'u8[1024]{0}', space=vmem, size = 0x400, scoped, tag = 'input window, operand 6, single buffered']
    #allocation9 [shape = 's32[1]{0}', space=sflag, size = 0x4, scoped, tag = 'scoped memory for sequence_encoder_forward.1']
    #allocation10 [shape = 'u8[1024]{0}', space=vmem, size = 0x400, scoped, tag = 'input window, operand 7, single buffered']
    #allocation11 [shape = 'u8[1024]{0}', space=vmem, size = 0x400, scoped, tag = 'input window, operand 8, single buffered']
    #allocation12 [shape = 's32[1]{0}', space=sflag, size = 0x4, scoped, tag = 'scoped memory for sequence_encoder_forward.1']
    #allocation13 [shape = 'u8[1024]{0}', space=vmem, size = 0x400, scoped, tag = 'input window, operand 10, single buffered']
    #allocation14 [shape = 'u8[1024]{0}', space=vmem, size = 0x400, scoped, tag = 'input window, operand 12, single buffered']
    #allocation15 [shape = 's32[1]{0}', space=sflag, size = 0x4, scoped, tag = 'scoped memory for sequence_encoder_forward.1']
    #allocation16 [shape = 'u8[1024]{0}', space=vmem, size = 0x400, scoped, tag = 'input window, operand 13, single buffered']
    #allocation17 [shape = 'u8[1024]{0}', space=vmem, size = 0x400, scoped, tag = 'input window, operand 14, single buffered']
    #allocation18 [shape = 's32[1]{0}', space=sflag, size = 0x4, scoped, tag = 'scoped memory for sequence_encoder_forward.1']
    #allocation19 [shape = 'u8[8192]{0}', space=vmem, size = 0x2000, scoped, tag = 'output window, operand 0, single buffered']
    %20 = vsyncpa [#allocation3], 0
    %21 = vsyncpa [#allocation6], 0
    %22 = vsyncpa [#allocation9], 0
    %23 = vsyncpa [#allocation12], 0
    %24 = vsyncpa [#allocation15], 0
    %25 = vsyncpa [#allocation18], 0
    %26 = vsyncpa [#allocation4], 0
    // Predicated region
    $region2: #{sequence_encoder_forward.1} parent=1 // pred_check
      _
    $region3: #{sequence_encoder_forward.1} parent=1 // pred_check_branch
      %28 = sbr.rel (0) target = $region5
    $region4: #{sequence_encoder_forward.1} parent=1 // pred_region
      %30 = vsyncadd [#allocation3], 0
      %s31 = sshll.u32 %s0, 4
      %s32 = int_to_ptr.hbm [resolvable:$true] %s31
      %s33 = sshll.u32 [#allocation2], 4
      %s34 = int_to_ptr.vmem [resolvable:$true] %s33
      %39 = dma.hbm_to_vmem [thread:$0]  %s32, 256, %s34, [#allocation3], 128, 128, 8
    $region5: #{sequence_encoder_forward.1} parent=1 // pred_fallthru
      _
    // Predicated region
    $region6: #{sequence_encoder_forward.1} parent=1 // pred_check
      _
    $region7: #{sequence_encoder_forward.1} parent=1 // pred_check_branch
      %41 = sbr.rel (0) target = $region9
    $region8: #{sequence_encoder_forward.1} parent=1 // pred_region
      _
    $region9: #{sequence_encoder_forward.1} parent=1 // pred_fallthru
      _
    // Predicated region
    $region10: #{sequence_encoder_forward.1} parent=1 // pred_check
      _
    $region11: #{sequence_encoder_forward.1} parent=1 // pred_check_branch
      %43 = sbr.rel (0) target = $region13
    $region12: #{sequence_encoder_forward.1} parent=1 // pred_region
      %45 = vsyncadd [#allocation6], 0
      %s47 = sshll.u32 %s2, 4
      %s48 = int_to_ptr.hbm [resolvable:$true] %s47
      %s49 = sshll.u32 [#allocation5], 4
      %s50 = int_to_ptr.vmem [resolvable:$true] %s49
      %52 = dma.hbm_to_vmem [thread:$0]  %s48, 128, %s50, [#allocation6]
    $region13: #{sequence_encoder_forward.1} parent=1 // pred_fallthru
      _
    // Predicated region
    $region14: #{sequence_encoder_forward.1} parent=1 // pred_check
      _
    $region15: #{sequence_encoder_forward.1} parent=1 // pred_check_branch
      %54 = sbr.rel (0) target = $region17
    $region16: #{sequence_encoder_forward.1} parent=1 // pred_region
      _
    $region17: #{sequence_encoder_forward.1} parent=1 // pred_fallthru
      _
    // Predicated region
    $region18: #{sequence_encoder_forward.1} parent=1 // pred_check
      _
    $region19: #{sequence_encoder_forward.1} parent=1 // pred_check_branch
      %56 = sbr.rel (0) target = $region21
    $region20: #{sequence_encoder_forward.1} parent=1 // pred_region
      %58 = vsyncadd [#allocation6], 0
      %s59 = sshll.u32 %s4, 4
      %s60 = int_to_ptr.hbm [resolvable:$true] %s59
      %s61 = sshll.u32 [#allocation7], 4
      %s62 = int_to_ptr.vmem [resolvable:$true] %s61
      %67 = dma.hbm_to_vmem [thread:$0]  %s60, 32, %s62, [#allocation6], 16, 16, 1
    $region21: #{sequence_encoder_forward.1} parent=1 // pred_fallthru
      _
    // Predicated region
    $region22: #{sequence_encoder_forward.1} parent=1 // pred_check
      _
    $region23: #{sequence_encoder_forward.1} parent=1 // pred_check_branch
      %69 = sbr.rel (0) target = $region25
    $region24: #{sequence_encoder_forward.1} parent=1 // pred_region
      _
    $region25: #{sequence_encoder_forward.1} parent=1 // pred_fallthru
      _
    // Predicated region
    $region26: #{sequence_encoder_forward.1} parent=1 // pred_check
      _
    $region27: #{sequence_encoder_forward.1} parent=1 // pred_check_branch
      %71 = sbr.rel (0) target = $region29
    $region28: #{sequence_encoder_forward.1} parent=1 // pred_region
      %73 = vsyncadd [#allocation9], 0
      %s74 = sshll.u32 %s6, 4
      %s75 = int_to_ptr.hbm [resolvable:$true] %s74
      %s76 = sshll.u32 [#allocation8], 4
      %s77 = int_to_ptr.vmem [resolvable:$true] %s76
      %82 = dma.hbm_to_vmem [thread:$0]  %s75, 32, %s77, [#allocation9], 16, 16, 1
    $region29: #{sequence_encoder_forward.1} parent=1 // pred_fallthru
      _
    // Predicated region
    $region30: #{sequence_encoder_forward.1} parent=1 // pred_check
      _
    $region31: #{sequence_encoder_forward.1} parent=1 // pred_check_branch
      %84 = sbr.rel (0) target = $region33
    $region32: #{sequence_encoder_forward.1} parent=1 // pred_region
      %86 = vsyncadd [#allocation9], 0
      %s87 = sshll.u32 %s7, 4
      %s88 = int_to_ptr.hbm [resolvable:$true] %s87
      %s89 = sshll.u32 [#allocation10], 4
      %s90 = int_to_ptr.vmem [resolvable:$true] %s89
      %95 = dma.hbm_to_vmem [thread:$0]  %s88, 32, %s90, [#allocation9], 16, 16, 1
    $region33: #{sequence_encoder_forward.1} parent=1 // pred_fallthru
      _
    // Predicated region
    $region34: #{sequence_encoder_forward.1} parent=1 // pred_check
      _
    $region35: #{sequence_encoder_forward.1} parent=1 // pred_check_branch
      %97 = sbr.rel (0) target = $region37
    $region36: #{sequence_encoder_forward.1} parent=1 // pred_region
      %99 = vsyncadd [#allocation12], 0
      %s100 = sshll.u32 %s8, 4
      %s101 = int_to_ptr.hbm [resolvable:$true] %s100
      %s102 = sshll.u32 [#allocation11], 4
      %s103 = int_to_ptr.vmem [resolvable:$true] %s102
      %108 = dma.hbm_to_vmem [thread:$0]  %s101, 32, %s103, [#allocation12], 16, 16, 1
    $region37: #{sequence_encoder_forward.1} parent=1 // pred_fallthru
      _
    // Predicated region
    $region38: #{sequence_encoder_forward.1} parent=1 // pred_check
      _
    $region39: #{sequence_encoder_forward.1} parent=1 // pred_check_branch
      %110 = sbr.rel (0) target = $region41
    $region40: #{sequence_encoder_forward.1} parent=1 // pred_region
      _
    $region41: #{sequence_encoder_forward.1} parent=1 // pred_fallthru
      _
    // Predicated region
    $region42: #{sequence_encoder_forward.1} parent=1 // pred_check
      _
    $region43: #{sequence_encoder_forward.1} parent=1 // pred_check_branch
      %112 = sbr.rel (0) target = $region45
    $region44: #{sequence_encoder_forward.1} parent=1 // pred_region
      %114 = vsyncadd [#allocation12], 0
      %s115 = sshll.u32 %s10, 4
      %s116 = int_to_ptr.hbm [resolvable:$true] %s115
      %s117 = sshll.u32 [#allocation13], 4
      %s118 = int_to_ptr.vmem [resolvable:$true] %s117
      %123 = dma.hbm_to_vmem [thread:$0]  %s116, 32, %s118, [#allocation12], 16, 16, 1
    $region45: #{sequence_encoder_forward.1} parent=1 // pred_fallthru
      _
    // Predicated region
    $region46: #{sequence_encoder_forward.1} parent=1 // pred_check
      _
    $region47: #{sequence_encoder_forward.1} parent=1 // pred_check_branch
      %125 = sbr.rel (0) target = $region49
    $region48: #{sequence_encoder_forward.1} parent=1 // pred_region
      _
    $region49: #{sequence_encoder_forward.1} parent=1 // pred_fallthru
      _
    // Predicated region
    $region50: #{sequence_encoder_forward.1} parent=1 // pred_check
      _
    $region51: #{sequence_encoder_forward.1} parent=1 // pred_check_branch
      %127 = sbr.rel (0) target = $region53
    $region52: #{sequence_encoder_forward.1} parent=1 // pred_region
      %129 = vsyncadd [#allocation15], 0
      %s130 = sshll.u32 %s12, 4
      %s131 = int_to_ptr.hbm [resolvable:$true] %s130
      %s132 = sshll.u32 [#allocation14], 4
      %s133 = int_to_ptr.vmem [resolvable:$true] %s132
      %138 = dma.hbm_to_vmem [thread:$0]  %s131, 32, %s133, [#allocation15], 16, 16, 1
    $region53: #{sequence_encoder_forward.1} parent=1 // pred_fallthru
      _
    // Predicated region
    $region54: #{sequence_encoder_forward.1} parent=1 // pred_check
      _
    $region55: #{sequence_encoder_forward.1} parent=1 // pred_check_branch
      %140 = sbr.rel (0) target = $region57
    $region56: #{sequence_encoder_forward.1} parent=1 // pred_region
      %142 = vsyncadd [#allocation15], 0
      %s143 = sshll.u32 %s13, 4
      %s144 = int_to_ptr.hbm [resolvable:$true] %s143
      %s145 = sshll.u32 [#allocation16], 4
      %s146 = int_to_ptr.vmem [resolvable:$true] %s145
      %151 = dma.hbm_to_vmem [thread:$0]  %s144, 32, %s146, [#allocation15], 16, 16, 1
    $region57: #{sequence_encoder_forward.1} parent=1 // pred_fallthru
      _
    // Predicated region
    $region58: #{sequence_encoder_forward.1} parent=1 // pred_check
      _
    $region59: #{sequence_encoder_forward.1} parent=1 // pred_check_branch
      %153 = sbr.rel (0) target = $region61
    $region60: #{sequence_encoder_forward.1} parent=1 // pred_region
      %155 = vsyncadd [#allocation18], 0
      %s156 = sshll.u32 %s14, 4
      %s157 = int_to_ptr.hbm [resolvable:$true] %s156
      %s158 = sshll.u32 [#allocation17], 4
      %s159 = int_to_ptr.vmem [resolvable:$true] %s158
      %164 = dma.hbm_to_vmem [thread:$0]  %s157, 32, %s159, [#allocation18], 16, 16, 1
    $region61: #{sequence_encoder_forward.1} parent=1 // pred_fallthru
      _
    // Predicated region
    $region62: #{sequence_encoder_forward.1} parent=1 // pred_check
      _
    $region63: #{sequence_encoder_forward.1} parent=1 // pred_check_branch
      %166 = sbr.rel (0) target = $region65
    $region64: #{sequence_encoder_forward.1} parent=1 // pred_region
      %168 = dma.done [#allocation3], 256
    $region65: #{sequence_encoder_forward.1} parent=1 // pred_fallthru
      _
    // Predicated region
    $region66: #{sequence_encoder_forward.1} parent=1 // pred_check
      _
    $region67: #{sequence_encoder_forward.1} parent=1 // pred_check_branch
      %170 = sbr.rel (0) target = $region69
    $region68: #{sequence_encoder_forward.1} parent=1 // pred_region
      %172 = dma.done [#allocation6], 128
    $region69: #{sequence_encoder_forward.1} parent=1 // pred_fallthru
      _
    // Predicated region
    $region70: #{sequence_encoder_forward.1} parent=1 // pred_check
      _
    $region71: #{sequence_encoder_forward.1} parent=1 // pred_check_branch
      %174 = sbr.rel (0) target = $region73
    $region72: #{sequence_encoder_forward.1} parent=1 // pred_region
      %176 = dma.done [#allocation6], 32
    $region73: #{sequence_encoder_forward.1} parent=1 // pred_fallthru
      _
    // Predicated region
    $region74: #{sequence_encoder_forward.1} parent=1 // pred_check
      _
    $region75: #{sequence_encoder_forward.1} parent=1 // pred_check_branch
      %178 = sbr.rel (0) target = $region77
    $region76: #{sequence_encoder_forward.1} parent=1 // pred_region
      %180 = dma.done [#allocation9], 32
    $region77: #{sequence_encoder_forward.1} parent=1 // pred_fallthru
      _
    // Predicated region
    $region78: #{sequence_encoder_forward.1} parent=1 // pred_check
      _
    $region79: #{sequence_encoder_forward.1} parent=1 // pred_check_branch
      %182 = sbr.rel (0) target = $region81
    $region80: #{sequence_encoder_forward.1} parent=1 // pred_region
      %184 = dma.done [#allocation9], 32
    $region81: #{sequence_encoder_forward.1} parent=1 // pred_fallthru
      _
    // Predicated region
    $region82: #{sequence_encoder_forward.1} parent=1 // pred_check
      _
    $region83: #{sequence_encoder_forward.1} parent=1 // pred_check_branch
      %186 = sbr.rel (0) target = $region85
    $region84: #{sequence_encoder_forward.1} parent=1 // pred_region
      %188 = dma.done [#allocation12], 32
    $region85: #{sequence_encoder_forward.1} parent=1 // pred_fallthru
      _
    // Predicated region
    $region86: #{sequence_encoder_forward.1} parent=1 // pred_check
      _
    $region87: #{sequence_encoder_forward.1} parent=1 // pred_check_branch
      %190 = sbr.rel (0) target = $region89
    $region88: #{sequence_encoder_forward.1} parent=1 // pred_region
      %192 = dma.done [#allocation12], 32
    $region89: #{sequence_encoder_forward.1} parent=1 // pred_fallthru
      _
    // Predicated region
    $region90: #{sequence_encoder_forward.1} parent=1 // pred_check
      _
    $region91: #{sequence_encoder_forward.1} parent=1 // pred_check_branch
      %194 = sbr.rel (0) target = $region93
    $region92: #{sequence_encoder_forward.1} parent=1 // pred_region
      %196 = dma.done [#allocation15], 32
    $region93: #{sequence_encoder_forward.1} parent=1 // pred_fallthru
      _
    // Predicated region
    $region94: #{sequence_encoder_forward.1} parent=1 // pred_check
      _
    $region95: #{sequence_encoder_forward.1} parent=1 // pred_check_branch
      %198 = sbr.rel (0) target = $region97
    $region96: #{sequence_encoder_forward.1} parent=1 // pred_region
      %200 = dma.done [#allocation15], 32
    $region97: #{sequence_encoder_forward.1} parent=1 // pred_fallthru
      _
    // Predicated region
    $region98: #{sequence_encoder_forward.1} parent=1 // pred_check
      _
    $region99: #{sequence_encoder_forward.1} parent=1 // pred_check_branch
      %202 = sbr.rel (0) target = $region101
    $region100: #{sequence_encoder_forward.1} parent=1 // pred_region
      %204 = dma.done [#allocation18], 32
    $region101: #{sequence_encoder_forward.1} parent=1 // pred_fallthru
      _
    %v205 = vld [vmem:[#allocation2] sm:$0xff]
    %v206 = vld [vmem:[#allocation2 + $0x8] sm:$0xff]
    %v207 = vld [vmem:[%s1] sm:$0xff]
    %v208 = vadd.f32 %v205, %v207
    %v209 = vadd.f32 %v206, %v207
    %v210 = vld [vmem:[#allocation5] sm:$0xff]
    %v211 = vld [vmem:[%s3] sm:$0xff]
    %v212 = vld [vmem:[%s3 + $0x8] sm:$0xff]
    %v213 = vld [vmem:[%s3 + $0x10] sm:$0xff]
    %v214 = vld [vmem:[%s3 + $0x18] sm:$0xff]
    %v215 = vld [vmem:[#allocation7] sm:$0x1]
    %v217 = vperm.slane %v215, 0
    %vm219 = vcmask 261120
    %v221 = vsel %vm219, %v208, 0
    %v224 = vsel %vm219, %v209, 0
    %226 = vmatpush.msra.mxu0 0.0
    %227 = vmatpush.msra.mxu0 0.0
    %228 = vmatpush.msra.mxu0 0.0
    %229 = vmatpush.msra.mxu0 0.0
    %230 = vmatpush.msra.mxu0 0.0
    %231 = vmatpush.msra.mxu0 0.0
    %232 = vmatpush.msra.mxu0 0.0
    %233 = vmatpush.msra.mxu0 0.0
    %234 = vmatpush.msra.mxu0 0.0
    %235 = vmatpush.msra.mxu0 0.0
    %236 = vmatpush.msra.mxu0 0.0
    %237 = vmatpush.msra.mxu0 0.0
    %238 = vmatpush.msra.mxu0 %v214
    %239 = vmatpush.msra.mxu0 %v213
    %240 = vmatpush.msra.mxu0 %v212
    %241 = vmatpush.msra.mxu0 %v211
    %242 = vmatmul.f32.gmra.mxu0 %v221
    %v243 = vpop.f32.mrf.mxu0
    %v244 = vadd.f32 %v217, %v243
    %245 = vmatmul.f32.gmra.mxu0 %v224
    %v246 = vpop.f32.mrf.mxu0
    %v247 = vadd.f32 %v217, %v246
    %248 = vdwg.mxu0
    %v249 = vmul.f32 %v244, 0.35355338
    %v250 = vmul.f32 %v247, 0.35355338
    %252 = vrot.lane.b32.xlu0 %v244, 96
    %v253 = vpop.permute.xlu0 %252
    %vm254 = vcmask 64512
    %v256 = vsel %vm254, %v249, 0
    %v258 = vsel %vm254, %v253, 0
    %260 = vmatpush.xpose.msra.mxu0 0.0
    %261 = vmatpush.xpose.msra.mxu0 0.0
    %262 = vmatpush.xpose.msra.mxu0 0.0
    %263 = vmatpush.xpose.msra.mxu0 0.0
    %264 = vmatpush.xpose.msra.mxu0 0.0
    %265 = vmatpush.xpose.msra.mxu0 0.0
    %266 = vmatpush.xpose.msra.mxu0 0.0
    %267 = vmatpush.xpose.msra.mxu0 0.0
    %268 = vmatpush.xpose.msra.mxu0 0.0
    %269 = vmatpush.xpose.msra.mxu0 0.0
    %270 = vmatpush.xpose.msra.mxu0 0.0
    %271 = vmatpush.xpose.msra.mxu0 0.0
    %272 = vmatpush.xpose.msra.mxu0 0.0
    %273 = vmatpush.xpose.msra.mxu0 0.0
    %274 = vmatpush.xpose.msra.mxu0 0.0
    %275 = vmatpush.xpose.msra.mxu0 %v258
    %276 = vmatmul.f32.gmra.mxu0 %v256
    %v277 = vpop.f32.mrf.mxu0
    %v278 = vadd.f32 %v210, %v277
    %279 = vdwg.mxu0
    %281 = vrot.lane.b32.xlu0 %v247, 96
    %v282 = vpop.permute.xlu0 %281
    %v284 = vsel %vm254, %v250, 0
    %v286 = vsel %vm254, %v282, 0
    %288 = vmatpush.xpose.msra.mxu0 0.0
    %289 = vmatpush.xpose.msra.mxu0 0.0
    %290 = vmatpush.xpose.msra.mxu0 0.0
    %291 = vmatpush.xpose.msra.mxu0 0.0
    %292 = vmatpush.xpose.msra.mxu0 0.0
    %293 = vmatpush.xpose.msra.mxu0 0.0
    %294 = vmatpush.xpose.msra.mxu0 0.0
    %295 = vmatpush.xpose.msra.mxu0 0.0
    %296 = vmatpush.xpose.msra.mxu0 0.0
    %297 = vmatpush.xpose.msra.mxu0 0.0
    %298 = vmatpush.xpose.msra.mxu0 0.0
    %299 = vmatpush.xpose.msra.mxu0 0.0
    %300 = vmatpush.xpose.msra.mxu0 0.0
    %301 = vmatpush.xpose.msra.mxu0 0.0
    %302 = vmatpush.xpose.msra.mxu0 0.0
    %303 = vmatpush.xpose.msra.mxu0 %v286
    %304 = vmatmul.f32.gmra.mxu0 %v284
    %v305 = vpop.f32.mrf.mxu0
    %v306 = vadd.f32 %v210, %v305
    %307 = vdwg.mxu0
    %v308 = vsel %vm254, %v278, -inf
    %309 = vmax.xlane.f32.xlu0 %v308
    %v310 = vpop.xlane.xlu0 %309
    %v311 = vsel %vm254, %v306, -inf
    %312 = vmax.xlane.f32.xlu0 %v311
    %v313 = vpop.xlane.xlu0 %312
    %v314 = vsub.f32 %v278, %v310
    %v315 = vsub.f32 %v306, %v313
    %v316 = vmul.f32 %v314, 1.442695
    %v317 = vpow.pop %v316
    %v318 = vmul.f32 %v315, 1.442695
    %v319 = vpow.pop %v318
    %v320 = vsel %vm254, %v317, 0.0
    %321 = vadd.xlane.f32.xlu0 %v320
    %v322 = vpop.xlane.xlu0 %321
    %v323 = vsel %vm254, %v319, 0.0
    %324 = vadd.xlane.f32.xlu0 %v323
    %v325 = vpop.xlane.xlu0 %324
    %v326 = vrcp.pop %v322
    %v327 = vmul.f32 %v322, %v326
    %v328 = vsub.f32 1.0, %v327
    %v329 = vmul.f32 %v326, %v328
    %v330 = vadd.f32 %v326, %v329
    %vm331 = vweird.f32 %v322
    %vm332 = vweird.f32 %v326
    %vm333 = vmor %vm331, %vm332
    %v334 = vsel %vm333, %v326, %v330
    %v335 = vand.u32 2147483647, %v322
    %vm336 = vcmp.eq.f32.partialorder %v335, 8.507059e+37
    %v337 = vand.u32 %v322, 2147483648
    %v338 = vor.u32 1.1754944e-38, %v337
    %v339 = vsel %vm336, %v338, %v334
    %v340 = vmul.f32 %v317, %v339
    %v341 = vrcp.pop %v325
    %v342 = vmul.f32 %v325, %v341
    %v343 = vsub.f32 1.0, %v342
    %v344 = vmul.f32 %v341, %v343
    %v345 = vadd.f32 %v341, %v344
    %vm346 = vweird.f32 %v325
    %vm347 = vweird.f32 %v341
    %vm348 = vmor %vm346, %vm347
    %v349 = vsel %vm348, %v341, %v345
    %v350 = vand.u32 2147483647, %v325
    %vm351 = vcmp.eq.f32.partialorder %v350, 8.507059e+37
    %v352 = vand.u32 %v325, 2147483648
    %v353 = vor.u32 1.1754944e-38, %v352
    %v354 = vsel %vm351, %v353, %v349
    %v355 = vmul.f32 %v319, %v354
    %356 = vrot.lane.b32.xlu0 %v244, 64
    %v357 = vpop.permute.xlu0 %356
    %v360 = vsel %vm254, %v340, 0
    %362 = vmatpush.msra.mxu0 0.0
    %363 = vmatpush.msra.mxu0 0.0
    %364 = vmatpush.msra.mxu0 0.0
    %365 = vmatpush.msra.mxu0 0.0
    %366 = vmatpush.msra.mxu0 0.0
    %367 = vmatpush.msra.mxu0 0.0
    %368 = vmatpush.msra.mxu0 0.0
    %369 = vmatpush.msra.mxu0 0.0
    %370 = vmatpush.msra.mxu0 0.0
    %371 = vmatpush.msra.mxu0 0.0
    %372 = vmatpush.msra.mxu0 0.0
    %373 = vmatpush.msra.mxu0 0.0
    %374 = vmatpush.msra.mxu0 0.0
    %375 = vmatpush.msra.mxu0 0.0
    %376 = vmatpush.msra.mxu0 0.0
    %377 = vmatpush.msra.mxu0 %v357
    %378 = vmatmul.f32.gmra.mxu0 %v360
    %v379 = vpop.f32.mrf.mxu0
    %v380 = vadd.f32 0.0, %v379
    %381 = vdwg.mxu0
    %382 = vrot.lane.b32.xlu0 %v247, 64
    %v383 = vpop.permute.xlu0 %382
    %v386 = vsel %vm254, %v355, 0
    %388 = vmatpush.msra.mxu0 0.0
    %389 = vmatpush.msra.mxu0 0.0
    %390 = vmatpush.msra.mxu0 0.0
    %391 = vmatpush.msra.mxu0 0.0
    %392 = vmatpush.msra.mxu0 0.0
    %393 = vmatpush.msra.mxu0 0.0
    %394 = vmatpush.msra.mxu0 0.0
    %395 = vmatpush.msra.mxu0 0.0
    %396 = vmatpush.msra.mxu0 0.0
    %397 = vmatpush.msra.mxu0 0.0
    %398 = vmatpush.msra.mxu0 0.0
    %399 = vmatpush.msra.mxu0 0.0
    %400 = vmatpush.msra.mxu0 0.0
    %401 = vmatpush.msra.mxu0 0.0
    %402 = vmatpush.msra.mxu0 0.0
    %403 = vmatpush.msra.mxu0 %v383
    %404 = vmatmul.f32.gmra.mxu0 %v386
    %v405 = vpop.f32.mrf.mxu0
    %v406 = vadd.f32 0.0, %v405
    %407 = vdwg.mxu0
    %408 = vrot.lane.b32.xlu0 %v249, 120
    %v409 = vpop.permute.xlu0 %408
    %410 = vrot.lane.b32.xlu0 %v244, 88
    %v411 = vpop.permute.xlu0 %410
    %v412 = vsel %vm254, %v409, 0
    %v414 = vsel %vm254, %v411, 0
    %416 = vmatpush.xpose.msra.mxu0 0.0
    %417 = vmatpush.xpose.msra.mxu0 0.0
    %418 = vmatpush.xpose.msra.mxu0 0.0
    %419 = vmatpush.xpose.msra.mxu0 0.0
    %420 = vmatpush.xpose.msra.mxu0 0.0
    %421 = vmatpush.xpose.msra.mxu0 0.0
    %422 = vmatpush.xpose.msra.mxu0 0.0
    %423 = vmatpush.xpose.msra.mxu0 0.0
    %424 = vmatpush.xpose.msra.mxu0 0.0
    %425 = vmatpush.xpose.msra.mxu0 0.0
    %426 = vmatpush.xpose.msra.mxu0 0.0
    %427 = vmatpush.xpose.msra.mxu0 0.0
    %428 = vmatpush.xpose.msra.mxu0 0.0
    %429 = vmatpush.xpose.msra.mxu0 0.0
    %430 = vmatpush.xpose.msra.mxu0 0.0
    %431 = vmatpush.xpose.msra.mxu0 %v414
    %432 = vmatmul.f32.gmra.mxu0 %v412
    %v433 = vpop.f32.mrf.mxu0
    %v434 = vadd.f32 %v210, %v433
    %435 = vdwg.mxu0
    %436 = vrot.lane.b32.xlu0 %v250, 120
    %v437 = vpop.permute.xlu0 %436
    %438 = vrot.lane.b32.xlu0 %v247, 88
    %v439 = vpop.permute.xlu0 %438
    %v440 = vsel %vm254, %v437, 0
    %v442 = vsel %vm254, %v439, 0
    %444 = vmatpush.xpose.msra.mxu0 0.0
    %445 = vmatpush.xpose.msra.mxu0 0.0
    %446 = vmatpush.xpose.msra.mxu0 0.0
    %447 = vmatpush.xpose.msra.mxu0 0.0
    %448 = vmatpush.xpose.msra.mxu0 0.0
    %449 = vmatpush.xpose.msra.mxu0 0.0
    %450 = vmatpush.xpose.msra.mxu0 0.0
    %451 = vmatpush.xpose.msra.mxu0 0.0
    %452 = vmatpush.xpose.msra.mxu0 0.0
    %453 = vmatpush.xpose.msra.mxu0 0.0
    %454 = vmatpush.xpose.msra.mxu0 0.0
    %455 = vmatpush.xpose.msra.mxu0 0.0
    %456 = vmatpush.xpose.msra.mxu0 0.0
    %457 = vmatpush.xpose.msra.mxu0 0.0
    %458 = vmatpush.xpose.msra.mxu0 0.0
    %459 = vmatpush.xpose.msra.mxu0 %v442
    %460 = vmatmul.f32.gmra.mxu0 %v440
    %v461 = vpop.f32.mrf.mxu0
    %v462 = vadd.f32 %v210, %v461
    %463 = vdwg.mxu0
    %v464 = vsel %vm254, %v434, -inf
    %465 = vmax.xlane.f32.xlu0 %v464
    %v466 = vpop.xlane.xlu0 %465
    %v467 = vsel %vm254, %v462, -inf
    %468 = vmax.xlane.f32.xlu0 %v467
    %v469 = vpop.xlane.xlu0 %468
    %v470 = vsub.f32 %v434, %v466
    %v471 = vsub.f32 %v462, %v469
    %v472 = vmul.f32 %v470, 1.442695
    %v473 = vpow.pop %v472
    %v474 = vmul.f32 %v471, 1.442695
    %v475 = vpow.pop %v474
    %v476 = vsel %vm254, %v473, 0.0
    %477 = vadd.xlane.f32.xlu0 %v476
    %v478 = vpop.xlane.xlu0 %477
    %v479 = vsel %vm254, %v475, 0.0
    %480 = vadd.xlane.f32.xlu0 %v479
    %v481 = vpop.xlane.xlu0 %480
    %v482 = vrcp.pop %v478
    %v483 = vmul.f32 %v478, %v482
    %v484 = vsub.f32 1.0, %v483
    %v485 = vmul.f32 %v482, %v484
    %v486 = vadd.f32 %v482, %v485
    %vm487 = vweird.f32 %v478
    %vm488 = vweird.f32 %v482
    %vm489 = vmor %vm487, %vm488
    %v490 = vsel %vm489, %v482, %v486
    %v491 = vand.u32 2147483647, %v478
    %vm492 = vcmp.eq.f32.partialorder %v491, 8.507059e+37
    %v493 = vand.u32 %v478, 2147483648
    %v494 = vor.u32 1.1754944e-38, %v493
    %v495 = vsel %vm492, %v494, %v490
    %v496 = vmul.f32 %v473, %v495
    %v497 = vrcp.pop %v481
    %v498 = vmul.f32 %v481, %v497
    %v499 = vsub.f32 1.0, %v498
    %v500 = vmul.f32 %v497, %v499
    %v501 = vadd.f32 %v497, %v500
    %vm502 = vweird.f32 %v481
    %vm503 = vweird.f32 %v497
    %vm504 = vmor %vm502, %vm503
    %v505 = vsel %vm504, %v497, %v501
    %v506 = vand.u32 2147483647, %v481
    %vm507 = vcmp.eq.f32.partialorder %v506, 8.507059e+37
    %v508 = vand.u32 %v481, 2147483648
    %v509 = vor.u32 1.1754944e-38, %v508
    %v510 = vsel %vm507, %v509, %v505
    %v511 = vmul.f32 %v475, %v510
    %512 = vrot.lane.b32.xlu0 %v244, 56
    %v513 = vpop.permute.xlu0 %512
    %v516 = vsel %vm254, %v496, 0
    %518 = vmatpush.msra.mxu0 0.0
    %519 = vmatpush.msra.mxu0 0.0
    %520 = vmatpush.msra.mxu0 0.0
    %521 = vmatpush.msra.mxu0 0.0
    %522 = vmatpush.msra.mxu0 0.0
    %523 = vmatpush.msra.mxu0 0.0
    %524 = vmatpush.msra.mxu0 0.0
    %525 = vmatpush.msra.mxu0 0.0
    %526 = vmatpush.msra.mxu0 0.0
    %527 = vmatpush.msra.mxu0 0.0
    %528 = vmatpush.msra.mxu0 0.0
    %529 = vmatpush.msra.mxu0 0.0
    %530 = vmatpush.msra.mxu0 0.0
    %531 = vmatpush.msra.mxu0 0.0
    %532 = vmatpush.msra.mxu0 0.0
    %533 = vmatpush.msra.mxu0 %v513
    %534 = vmatmul.f32.gmra.mxu0 %v516
    %v535 = vpop.f32.mrf.mxu0
    %v536 = vadd.f32 0.0, %v535
    %537 = vdwg.mxu0
    %538 = vrot.lane.b32.xlu0 %v247, 56
    %v539 = vpop.permute.xlu0 %538
    %v542 = vsel %vm254, %v511, 0
    %544 = vmatpush.msra.mxu0 0.0
    %545 = vmatpush.msra.mxu0 0.0
    %546 = vmatpush.msra.mxu0 0.0
    %547 = vmatpush.msra.mxu0 0.0
    %548 = vmatpush.msra.mxu0 0.0
    %549 = vmatpush.msra.mxu0 0.0
    %550 = vmatpush.msra.mxu0 0.0
    %551 = vmatpush.msra.mxu0 0.0
    %552 = vmatpush.msra.mxu0 0.0
    %553 = vmatpush.msra.mxu0 0.0
    %554 = vmatpush.msra.mxu0 0.0
    %555 = vmatpush.msra.mxu0 0.0
    %556 = vmatpush.msra.mxu0 0.0
    %557 = vmatpush.msra.mxu0 0.0
    %558 = vmatpush.msra.mxu0 0.0
    %559 = vmatpush.msra.mxu0 %v539
    %560 = vmatmul.f32.gmra.mxu0 %v542
    %v561 = vpop.f32.mrf.mxu0
    %v562 = vadd.f32 0.0, %v561
    %563 = vdwg.mxu0
    %564 = vrot.lane.b32.xlu0 %v249, 112
    %v565 = vpop.permute.xlu0 %564
    %566 = vrot.lane.b32.xlu0 %v244, 80
    %v567 = vpop.permute.xlu0 %566
    %v568 = vsel %vm254, %v565, 0
    %v570 = vsel %vm254, %v567, 0
    %572 = vmatpush.xpose.msra.mxu0 0.0
    %573 = vmatpush.xpose.msra.mxu0 0.0
    %574 = vmatpush.xpose.msra.mxu0 0.0
    %575 = vmatpush.xpose.msra.mxu0 0.0
    %576 = vmatpush.xpose.msra.mxu0 0.0
    %577 = vmatpush.xpose.msra.mxu0 0.0
    %578 = vmatpush.xpose.msra.mxu0 0.0
    %579 = vmatpush.xpose.msra.mxu0 0.0
    %580 = vmatpush.xpose.msra.mxu0 0.0
    %581 = vmatpush.xpose.msra.mxu0 0.0
    %582 = vmatpush.xpose.msra.mxu0 0.0
    %583 = vmatpush.xpose.msra.mxu0 0.0
    %584 = vmatpush.xpose.msra.mxu0 0.0
    %585 = vmatpush.xpose.msra.mxu0 0.0
    %586 = vmatpush.xpose.msra.mxu0 0.0
    %587 = vmatpush.xpose.msra.mxu0 %v570
    %588 = vmatmul.f32.gmra.mxu0 %v568
    %v589 = vpop.f32.mrf.mxu0
    %v590 = vadd.f32 %v210, %v589
    %591 = vdwg.mxu0
    %592 = vrot.lane.b32.xlu0 %v250, 112
    %v593 = vpop.permute.xlu0 %592
    %594 = vrot.lane.b32.xlu0 %v247, 80
    %v595 = vpop.permute.xlu0 %594
    %v596 = vsel %vm254, %v593, 0
    %v598 = vsel %vm254, %v595, 0
    %600 = vmatpush.xpose.msra.mxu0 0.0
    %601 = vmatpush.xpose.msra.mxu0 0.0
    %602 = vmatpush.xpose.msra.mxu0 0.0
    %603 = vmatpush.xpose.msra.mxu0 0.0
    %604 = vmatpush.xpose.msra.mxu0 0.0
    %605 = vmatpush.xpose.msra.mxu0 0.0
    %606 = vmatpush.xpose.msra.mxu0 0.0
    %607 = vmatpush.xpose.msra.mxu0 0.0
    %608 = vmatpush.xpose.msra.mxu0 0.0
    %609 = vmatpush.xpose.msra.mxu0 0.0
    %610 = vmatpush.xpose.msra.mxu0 0.0
    %611 = vmatpush.xpose.msra.mxu0 0.0
    %612 = vmatpush.xpose.msra.mxu0 0.0
    %613 = vmatpush.xpose.msra.mxu0 0.0
    %614 = vmatpush.xpose.msra.mxu0 0.0
    %615 = vmatpush.xpose.msra.mxu0 %v598
    %616 = vmatmul.f32.gmra.mxu0 %v596
    %v617 = vpop.f32.mrf.mxu0
    %v618 = vadd.f32 %v210, %v617
    %619 = vdwg.mxu0
    %v620 = vsel %vm254, %v590, -inf
    %621 = vmax.xlane.f32.xlu0 %v620
    %v622 = vpop.xlane.xlu0 %621
    %v623 = vsel %vm254, %v618, -inf
    %624 = vmax.xlane.f32.xlu0 %v623
    %v625 = vpop.xlane.xlu0 %624
    %v626 = vsub.f32 %v590, %v622
    %v627 = vsub.f32 %v618, %v625
    %v628 = vmul.f32 %v626, 1.442695
    %v629 = vpow.pop %v628
    %v630 = vmul.f32 %v627, 1.442695
    %v631 = vpow.pop %v630
    %v632 = vsel %vm254, %v629, 0.0
    %633 = vadd.xlane.f32.xlu0 %v632
    %v634 = vpop.xlane.xlu0 %633
    %v635 = vsel %vm254, %v631, 0.0
    %636 = vadd.xlane.f32.xlu0 %v635
    %v637 = vpop.xlane.xlu0 %636
    %v638 = vrcp.pop %v634
    %v639 = vmul.f32 %v634, %v638
    %v640 = vsub.f32 1.0, %v639
    %v641 = vmul.f32 %v638, %v640
    %v642 = vadd.f32 %v638, %v641
    %vm643 = vweird.f32 %v634
    %vm644 = vweird.f32 %v638
    %vm645 = vmor %vm643, %vm644
    %v646 = vsel %vm645, %v638, %v642
    %v647 = vand.u32 2147483647, %v634
    %vm648 = vcmp.eq.f32.partialorder %v647, 8.507059e+37
    %v649 = vand.u32 %v634, 2147483648
    %v650 = vor.u32 1.1754944e-38, %v649
    %v651 = vsel %vm648, %v650, %v646
    %v652 = vmul.f32 %v629, %v651
    %v653 = vrcp.pop %v637
    %v654 = vmul.f32 %v637, %v653
    %v655 = vsub.f32 1.0, %v654
    %v656 = vmul.f32 %v653, %v655
    %v657 = vadd.f32 %v653, %v656
    %vm658 = vweird.f32 %v637
    %vm659 = vweird.f32 %v653
    %vm660 = vmor %vm658, %vm659
    %v661 = vsel %vm660, %v653, %v657
    %v662 = vand.u32 2147483647, %v637
    %vm663 = vcmp.eq.f32.partialorder %v662, 8.507059e+37
    %v664 = vand.u32 %v637, 2147483648
    %v665 = vor.u32 1.1754944e-38, %v664
    %v666 = vsel %vm663, %v665, %v661
    %v667 = vmul.f32 %v631, %v666
    %668 = vrot.lane.b32.xlu0 %v244, 48
    %v669 = vpop.permute.xlu0 %668
    %v672 = vsel %vm254, %v652, 0
    %674 = vmatpush.msra.mxu0 0.0
    %675 = vmatpush.msra.mxu0 0.0
    %676 = vmatpush.msra.mxu0 0.0
    %677 = vmatpush.msra.mxu0 0.0
    %678 = vmatpush.msra.mxu0 0.0
    %679 = vmatpush.msra.mxu0 0.0
    %680 = vmatpush.msra.mxu0 0.0
    %681 = vmatpush.msra.mxu0 0.0
    %682 = vmatpush.msra.mxu0 0.0
    %683 = vmatpush.msra.mxu0 0.0
    %684 = vmatpush.msra.mxu0 0.0
    %685 = vmatpush.msra.mxu0 0.0
    %686 = vmatpush.msra.mxu0 0.0
    %687 = vmatpush.msra.mxu0 0.0
    %688 = vmatpush.msra.mxu0 0.0
    %689 = vmatpush.msra.mxu0 %v669
    %690 = vmatmul.f32.gmra.mxu0 %v672
    %v691 = vpop.f32.mrf.mxu0
    %v692 = vadd.f32 0.0, %v691
    %693 = vdwg.mxu0
    %694 = vrot.lane.b32.xlu0 %v247, 48
    %v695 = vpop.permute.xlu0 %694
    %v698 = vsel %vm254, %v667, 0
    %700 = vmatpush.msra.mxu0 0.0
    %701 = vmatpush.msra.mxu0 0.0
    %702 = vmatpush.msra.mxu0 0.0
    %703 = vmatpush.msra.mxu0 0.0
    %704 = vmatpush.msra.mxu0 0.0
    %705 = vmatpush.msra.mxu0 0.0
    %706 = vmatpush.msra.mxu0 0.0
    %707 = vmatpush.msra.mxu0 0.0
    %708 = vmatpush.msra.mxu0 0.0
    %709 = vmatpush.msra.mxu0 0.0
    %710 = vmatpush.msra.mxu0 0.0
    %711 = vmatpush.msra.mxu0 0.0
    %712 = vmatpush.msra.mxu0 0.0
    %713 = vmatpush.msra.mxu0 0.0
    %714 = vmatpush.msra.mxu0 0.0
    %715 = vmatpush.msra.mxu0 %v695
    %716 = vmatmul.f32.gmra.mxu0 %v698
    %v717 = vpop.f32.mrf.mxu0
    %v718 = vadd.f32 0.0, %v717
    %719 = vdwg.mxu0
    %720 = vrot.lane.b32.xlu0 %v249, 104
    %v721 = vpop.permute.xlu0 %720
    %722 = vrot.lane.b32.xlu0 %v244, 72
    %v723 = vpop.permute.xlu0 %722
    %v724 = vsel %vm254, %v721, 0
    %v726 = vsel %vm254, %v723, 0
    %728 = vmatpush.xpose.msra.mxu0 0.0
    %729 = vmatpush.xpose.msra.mxu0 0.0
    %730 = vmatpush.xpose.msra.mxu0 0.0
    %731 = vmatpush.xpose.msra.mxu0 0.0
    %732 = vmatpush.xpose.msra.mxu0 0.0
    %733 = vmatpush.xpose.msra.mxu0 0.0
    %734 = vmatpush.xpose.msra.mxu0 0.0
    %735 = vmatpush.xpose.msra.mxu0 0.0
    %736 = vmatpush.xpose.msra.mxu0 0.0
    %737 = vmatpush.xpose.msra.mxu0 0.0
    %738 = vmatpush.xpose.msra.mxu0 0.0
    %739 = vmatpush.xpose.msra.mxu0 0.0
    %740 = vmatpush.xpose.msra.mxu0 0.0
    %741 = vmatpush.xpose.msra.mxu0 0.0
    %742 = vmatpush.xpose.msra.mxu0 0.0
    %743 = vmatpush.xpose.msra.mxu0 %v726
    %744 = vmatmul.f32.gmra.mxu0 %v724
    %v745 = vpop.f32.mrf.mxu0
    %v746 = vadd.f32 %v210, %v745
    %747 = vdwg.mxu0
    %748 = vrot.lane.b32.xlu0 %v250, 104
    %v749 = vpop.permute.xlu0 %748
    %750 = vrot.lane.b32.xlu0 %v247, 72
    %v751 = vpop.permute.xlu0 %750
    %v752 = vsel %vm254, %v749, 0
    %v754 = vsel %vm254, %v751, 0
    %756 = vmatpush.xpose.msra.mxu0 0.0
    %757 = vmatpush.xpose.msra.mxu0 0.0
    %758 = vmatpush.xpose.msra.mxu0 0.0
    %759 = vmatpush.xpose.msra.mxu0 0.0
    %760 = vmatpush.xpose.msra.mxu0 0.0
    %761 = vmatpush.xpose.msra.mxu0 0.0
    %762 = vmatpush.xpose.msra.mxu0 0.0
    %763 = vmatpush.xpose.msra.mxu0 0.0
    %764 = vmatpush.xpose.msra.mxu0 0.0
    %765 = vmatpush.xpose.msra.mxu0 0.0
    %766 = vmatpush.xpose.msra.mxu0 0.0
    %767 = vmatpush.xpose.msra.mxu0 0.0
    %768 = vmatpush.xpose.msra.mxu0 0.0
    %769 = vmatpush.xpose.msra.mxu0 0.0
    %770 = vmatpush.xpose.msra.mxu0 0.0
    %771 = vmatpush.xpose.msra.mxu0 %v754
    %772 = vmatmul.f32.gmra.mxu0 %v752
    %v773 = vpop.f32.mrf.mxu0
    %v774 = vadd.f32 %v210, %v773
    %775 = vdwg.mxu0
    %v776 = vsel %vm254, %v746, -inf
    %777 = vmax.xlane.f32.xlu0 %v776
    %v778 = vpop.xlane.xlu0 %777
    %v779 = vsel %vm254, %v774, -inf
    %780 = vmax.xlane.f32.xlu0 %v779
    %v781 = vpop.xlane.xlu0 %780
    %v782 = vsub.f32 %v746, %v778
    %v783 = vsub.f32 %v774, %v781
    %v784 = vmul.f32 %v782, 1.442695
    %v785 = vpow.pop %v784
    %v786 = vmul.f32 %v783, 1.442695
    %v787 = vpow.pop %v786
    %v788 = vsel %vm254, %v785, 0.0
    %789 = vadd.xlane.f32.xlu0 %v788
    %v790 = vpop.xlane.xlu0 %789
    %v791 = vsel %vm254, %v787, 0.0
    %792 = vadd.xlane.f32.xlu0 %v791
    %v793 = vpop.xlane.xlu0 %792
    %v794 = vrcp.pop %v790
    %v795 = vmul.f32 %v790, %v794
    %v796 = vsub.f32 1.0, %v795
    %v797 = vmul.f32 %v794, %v796
    %v798 = vadd.f32 %v794, %v797
    %vm799 = vweird.f32 %v790
    %vm800 = vweird.f32 %v794
    %vm801 = vmor %vm799, %vm800
    %v802 = vsel %vm801, %v794, %v798
    %v803 = vand.u32 2147483647, %v790
    %vm804 = vcmp.eq.f32.partialorder %v803, 8.507059e+37
    %v805 = vand.u32 %v790, 2147483648
    %v806 = vor.u32 1.1754944e-38, %v805
    %v807 = vsel %vm804, %v806, %v802
    %v808 = vmul.f32 %v785, %v807
    %v809 = vrcp.pop %v793
    %v810 = vmul.f32 %v793, %v809
    %v811 = vsub.f32 1.0, %v810
    %v812 = vmul.f32 %v809, %v811
    %v813 = vadd.f32 %v809, %v812
    %vm814 = vweird.f32 %v793
    %vm815 = vweird.f32 %v809
    %vm816 = vmor %vm814, %vm815
    %v817 = vsel %vm816, %v809, %v813
    %v818 = vand.u32 2147483647, %v793
    %vm819 = vcmp.eq.f32.partialorder %v818, 8.507059e+37
    %v820 = vand.u32 %v793, 2147483648
    %v821 = vor.u32 1.1754944e-38, %v820
    %v822 = vsel %vm819, %v821, %v817
    %v823 = vmul.f32 %v787, %v822
    %824 = vrot.lane.b32.xlu0 %v244, 40
    %v825 = vpop.permute.xlu0 %824
    %v828 = vsel %vm254, %v808, 0
    %830 = vmatpush.msra.mxu0 0.0
    %831 = vmatpush.msra.mxu0 0.0
    %832 = vmatpush.msra.mxu0 0.0
    %833 = vmatpush.msra.mxu0 0.0
    %834 = vmatpush.msra.mxu0 0.0
    %835 = vmatpush.msra.mxu0 0.0
    %836 = vmatpush.msra.mxu0 0.0
    %837 = vmatpush.msra.mxu0 0.0
    %838 = vmatpush.msra.mxu0 0.0
    %839 = vmatpush.msra.mxu0 0.0
    %840 = vmatpush.msra.mxu0 0.0
    %841 = vmatpush.msra.mxu0 0.0
    %842 = vmatpush.msra.mxu0 0.0
    %843 = vmatpush.msra.mxu0 0.0
    %844 = vmatpush.msra.mxu0 0.0
    %845 = vmatpush.msra.mxu0 %v825
    %846 = vmatmul.f32.gmra.mxu0 %v828
    %v847 = vpop.f32.mrf.mxu0
    %v848 = vadd.f32 0.0, %v847
    %849 = vdwg.mxu0
    %850 = vrot.lane.b32.xlu0 %v247, 40
    %v851 = vpop.permute.xlu0 %850
    %v854 = vsel %vm254, %v823, 0
    %856 = vmatpush.msra.mxu0 0.0
    %857 = vmatpush.msra.mxu0 0.0
    %858 = vmatpush.msra.mxu0 0.0
    %859 = vmatpush.msra.mxu0 0.0
    %860 = vmatpush.msra.mxu0 0.0
    %861 = vmatpush.msra.mxu0 0.0
    %862 = vmatpush.msra.mxu0 0.0
    %863 = vmatpush.msra.mxu0 0.0
    %864 = vmatpush.msra.mxu0 0.0
    %865 = vmatpush.msra.mxu0 0.0
    %866 = vmatpush.msra.mxu0 0.0
    %867 = vmatpush.msra.mxu0 0.0
    %868 = vmatpush.msra.mxu0 0.0
    %869 = vmatpush.msra.mxu0 0.0
    %870 = vmatpush.msra.mxu0 0.0
    %871 = vmatpush.msra.mxu0 %v851
    %872 = vmatmul.f32.gmra.mxu0 %v854
    %v873 = vpop.f32.mrf.mxu0
    %v874 = vadd.f32 0.0, %v873
    %875 = vdwg.mxu0
    %878 = vrot.lane.b32.xlu0 %v536, 8
    %v879 = vpop.permute.xlu0 %878
    %880 = vrot.lane.b32.xlu0 %v562, 8
    %v881 = vpop.permute.xlu0 %880
    %886 = vrot.lane.b32.xlu0 %v692, 16
    %v887 = vpop.permute.xlu0 %886
    %888 = vrot.lane.b32.xlu0 %v718, 16
    %v889 = vpop.permute.xlu0 %888
    %894 = vrot.lane.b32.xlu0 %v848, 24
    %v895 = vpop.permute.xlu0 %894
    %896 = vrot.lane.b32.xlu0 %v874, 24
    %v897 = vpop.permute.xlu0 %896
    %v900 = vsel %vm254, %v380, %v879
    %v901 = vsel %vm254, %v406, %v881
    %vm902 = vcmask 130048
    %v903 = vsel %vm902, %v900, %v887
    %v904 = vsel %vm902, %v901, %v889
    %vm905 = vcmask 195584
    %v906 = vsel %vm905, %v903, %v895
    %v907 = vsel %vm905, %v904, %v897
    %v908 = vld [vmem:[%s5] sm:$0xff]
    %v909 = vld [vmem:[%s5 + $0x8] sm:$0xff]
    %v910 = vld [vmem:[%s5 + $0x10] sm:$0xff]
    %v911 = vld [vmem:[%s5 + $0x18] sm:$0xff]
    %v912 = vld [vmem:[#allocation8] sm:$0x1]
    %v914 = vperm.slane %v912, 0
    %v917 = vsel %vm219, %v906, 0
    %v920 = vsel %vm219, %v907, 0
    %922 = vmatpush.msra.mxu0 0.0
    %923 = vmatpush.msra.mxu0 0.0
    %924 = vmatpush.msra.mxu0 0.0
    %925 = vmatpush.msra.mxu0 0.0
    %926 = vmatpush.msra.mxu0 0.0
    %927 = vmatpush.msra.mxu0 0.0
    %928 = vmatpush.msra.mxu0 0.0
    %929 = vmatpush.msra.mxu0 0.0
    %930 = vmatpush.msra.mxu0 0.0
    %931 = vmatpush.msra.mxu0 0.0
    %932 = vmatpush.msra.mxu0 0.0
    %933 = vmatpush.msra.mxu0 0.0
    %934 = vmatpush.msra.mxu0 %v911
    %935 = vmatpush.msra.mxu0 %v910
    %936 = vmatpush.msra.mxu0 %v909
    %937 = vmatpush.msra.mxu0 %v908
    %938 = vmatmul.f32.gmra.mxu0 %v917
    %v939 = vpop.f32.mrf.mxu0
    %v940 = vadd.f32 %v914, %v939
    %941 = vmatmul.f32.gmra.mxu0 %v920
    %v942 = vpop.f32.mrf.mxu0
    %v943 = vadd.f32 %v914, %v942
    %944 = vdwg.mxu0
    %v945 = vadd.f32 %v208, %v940
    %v946 = vadd.f32 %v209, %v943
    %v947 = vld [vmem:[#allocation10] sm:$0x1]
    %v948 = vld [vmem:[#allocation11] sm:$0x1]
    %v949 = vsel %vm219, %v945, 0.0
    %950 = vadd.xlane.f32.xlu0 %v949
    %v951 = vpop.xlane.xlu0 %950
    %v952 = vsel %vm219, %v946, 0.0
    %953 = vadd.xlane.f32.xlu0 %v952
    %v954 = vpop.xlane.xlu0 %953
    %v955 = vrcp.pop 32.0
    %v956 = vmul.f32 32.0, %v955
    %v957 = vsub.f32 1.0, %v956
    %v958 = vmul.f32 %v955, %v957
    %v959 = vadd.f32 %v955, %v958
    %vm960 = vweird.f32 %v955
    %v961 = vsel %vm960, %v955, %v959
    %v962 = vmul.f32 %v951, %v961
    %v963 = vmul.f32 %v954, %v961
    %v964 = vsub.f32 %v945, %v962
    %v965 = vsub.f32 %v946, %v963
    %v966 = vmul.f32 %v964, %v964
    %v967 = vmul.f32 %v965, %v965
    %v968 = vsel %vm219, %v966, 0.0
    %969 = vadd.xlane.f32.xlu0 %v968
    %v970 = vpop.xlane.xlu0 %969
    %v971 = vsel %vm219, %v967, 0.0
    %972 = vadd.xlane.f32.xlu0 %v971
    %v973 = vpop.xlane.xlu0 %972
    %v974 = vmul.f32 %v970, %v961
    %v975 = vmul.f32 %v973, %v961
    %v976 = vadd.f32 %v974, 1e-05
    %v977 = vadd.f32 %v975, 1e-05
    %v978 = vrsqrt.pop %v976
    %v979 = vmul.f32 %v978, %v976
    %v980 = vmul.f32 %v979, %v978
    %v981 = vmul.f32 0.5, %v980
    %v982 = vsub.f32 1.5, %v981
    %v983 = vmul.f32 %v978, %v982
    %vm984 = vweird.f32 %v976
    %vm985 = vweird.f32 %v978
    %vm986 = vmor %vm984, %vm985
    %v987 = vsel %vm986, %v978, %v983
    %v988 = vrsqrt.pop %v977
    %v989 = vmul.f32 %v988, %v977
    %v990 = vmul.f32 %v989, %v988
    %v991 = vmul.f32 0.5, %v990
    %v992 = vsub.f32 1.5, %v991
    %v993 = vmul.f32 %v988, %v992
    %vm994 = vweird.f32 %v977
    %vm995 = vweird.f32 %v988
    %vm996 = vmor %vm994, %vm995
    %v997 = vsel %vm996, %v988, %v993
    %v998 = vmul.f32 %v964, %v987
    %v999 = vmul.f32 %v965, %v997
    %v1001 = vperm.slane %v947, 0
    %v1003 = vmul.f32 %v998, %v1001
    %v1004 = vmul.f32 %v999, %v1001
    %v1006 = vperm.slane %v948, 0
    %v1008 = vadd.f32 %v1003, %v1006
    %v1009 = vadd.f32 %v1004, %v1006
    %v1010 = vld [vmem:[%s9] sm:$0xff]
    %v1011 = vld [vmem:[%s9 + $0x8] sm:$0xff]
    %v1012 = vld [vmem:[%s9 + $0x10] sm:$0xff]
    %v1013 = vld [vmem:[%s9 + $0x18] sm:$0xff]
    %v1014 = vld [vmem:[#allocation13] sm:$0x1]
    %v1016 = vperm.slane %v1014, 0
    %v1019 = vsel %vm219, %v1008, 0
    %v1022 = vsel %vm219, %v1009, 0
    %1024 = vmatpush.msra.mxu0 0.0
    %1025 = vmatpush.msra.mxu0 0.0
    %1026 = vmatpush.msra.mxu0 0.0
    %1027 = vmatpush.msra.mxu0 0.0
    %1028 = vmatpush.msra.mxu0 0.0
    %1029 = vmatpush.msra.mxu0 0.0
    %1030 = vmatpush.msra.mxu0 0.0
    %1031 = vmatpush.msra.mxu0 0.0
    %1032 = vmatpush.msra.mxu0 0.0
    %1033 = vmatpush.msra.mxu0 0.0
    %1034 = vmatpush.msra.mxu0 0.0
    %1035 = vmatpush.msra.mxu0 0.0
    %1036 = vmatpush.msra.mxu0 %v1013
    %1037 = vmatpush.msra.mxu0 %v1012
    %1038 = vmatpush.msra.mxu0 %v1011
    %1039 = vmatpush.msra.mxu0 %v1010
    %1040 = vmatmul.f32.gmra.mxu0 %v1019
    %v1041 = vpop.f32.mrf.mxu0
    %v1042 = vadd.f32 %v1016, %v1041
    %1043 = vmatmul.f32.gmra.mxu0 %v1022
    %v1044 = vpop.f32.mrf.mxu0
    %v1045 = vadd.f32 %v1016, %v1044
    %1046 = vdwg.mxu0
    %v1047 = vmax.f32 %v1042, 0.0
    %v1048 = vmax.f32 %v1045, 0.0
    %v1049 = vld [vmem:[%s11] sm:$0xff]
    %v1050 = vld [vmem:[%s11 + $0x8] sm:$0xff]
    %v1051 = vld [vmem:[%s11 + $0x10] sm:$0xff]
    %v1052 = vld [vmem:[%s11 + $0x18] sm:$0xff]
    %v1053 = vld [vmem:[%s11 + $0x20] sm:$0xff]
    %v1054 = vld [vmem:[%s11 + $0x28] sm:$0xff]
    %v1055 = vld [vmem:[%s11 + $0x30] sm:$0xff]
    %v1056 = vld [vmem:[%s11 + $0x38] sm:$0xff]
    %v1057 = vld [vmem:[#allocation14] sm:$0x1]
    %v1059 = vperm.slane %v1057, 0
    %vm1061 = vcmask 523264
    %v1063 = vsel %vm1061, %v1047, 0
    %v1066 = vsel %vm1061, %v1048, 0
    %1068 = vmatpush.msra.mxu0 0.0
    %1069 = vmatpush.msra.mxu0 0.0
    %1070 = vmatpush.msra.mxu0 0.0
    %1071 = vmatpush.msra.mxu0 0.0
    %1072 = vmatpush.msra.mxu0 0.0
    %1073 = vmatpush.msra.mxu0 0.0
    %1074 = vmatpush.msra.mxu0 0.0
    %1075 = vmatpush.msra.mxu0 0.0
    %1076 = vmatpush.msra.mxu0 %v1056
    %1077 = vmatpush.msra.mxu0 %v1055
    %1078 = vmatpush.msra.mxu0 %v1054
    %1079 = vmatpush.msra.mxu0 %v1053
    %1080 = vmatpush.msra.mxu0 %v1052
    %1081 = vmatpush.msra.mxu0 %v1051
    %1082 = vmatpush.msra.mxu0 %v1050
    %1083 = vmatpush.msra.mxu0 %v1049
    %1084 = vmatmul.f32.gmra.mxu0 %v1063
    %v1085 = vpop.f32.mrf.mxu0
    %v1086 = vadd.f32 %v1059, %v1085
    %1087 = vmatmul.f32.gmra.mxu0 %v1066
    %v1088 = vpop.f32.mrf.mxu0
    %v1089 = vadd.f32 %v1059, %v1088
    %1090 = vdwg.mxu0
    %v1091 = vadd.f32 %v1008, %v1086
    %v1092 = vadd.f32 %v1009, %v1089
    %v1093 = vld [vmem:[#allocation16] sm:$0x1]
    %v1094 = vld [vmem:[#allocation17] sm:$0x1]
    %v1095 = vsel %vm219, %v1091, 0.0
    %1096 = vadd.xlane.f32.xlu0 %v1095
    %v1097 = vpop.xlane.xlu0 %1096
    %v1098 = vsel %vm219, %v1092, 0.0
    %1099 = vadd.xlane.f32.xlu0 %v1098
    %v1100 = vpop.xlane.xlu0 %1099
    %v1101 = vmul.f32 %v1097, %v961
    %v1102 = vmul.f32 %v1100, %v961
    %v1103 = vsub.f32 %v1091, %v1101
    %v1104 = vsub.f32 %v1092, %v1102
    %v1105 = vmul.f32 %v1103, %v1103
    %v1106 = vmul.f32 %v1104, %v1104
    %v1107 = vsel %vm219, %v1105, 0.0
    %1108 = vadd.xlane.f32.xlu0 %v1107
    %v1109 = vpop.xlane.xlu0 %1108
    %v1110 = vsel %vm219, %v1106, 0.0
    %1111 = vadd.xlane.f32.xlu0 %v1110
    %v1112 = vpop.xlane.xlu0 %1111
    %v1113 = vmul.f32 %v1109, %v961
    %v1114 = vmul.f32 %v1112, %v961
    %v1115 = vadd.f32 %v1113, 1e-05
    %v1116 = vadd.f32 %v1114, 1e-05
    %v1117 = vrsqrt.pop %v1115
    %v1118 = vmul.f32 %v1117, %v1115
    %v1119 = vmul.f32 %v1118, %v1117
    %v1120 = vmul.f32 0.5, %v1119
    %v1121 = vsub.f32 1.5, %v1120
    %v1122 = vmul.f32 %v1117, %v1121
    %vm1123 = vweird.f32 %v1115
    %vm1124 = vweird.f32 %v1117
    %vm1125 = vmor %vm1123, %vm1124
    %v1126 = vsel %vm1125, %v1117, %v1122
    %v1127 = vrsqrt.pop %v1116
    %v1128 = vmul.f32 %v1127, %v1116
    %v1129 = vmul.f32 %v1128, %v1127
    %v1130 = vmul.f32 0.5, %v1129
    %v1131 = vsub.f32 1.5, %v1130
    %v1132 = vmul.f32 %v1127, %v1131
    %vm1133 = vweird.f32 %v1116
    %vm1134 = vweird.f32 %v1127
    %vm1135 = vmor %vm1133, %vm1134
    %v1136 = vsel %vm1135, %v1127, %v1132
    %v1137 = vmul.f32 %v1103, %v1126
    %v1138 = vmul.f32 %v1104, %v1136
    %v1140 = vperm.slane %v1093, 0
    %v1142 = vmul.f32 %v1137, %v1140
    %v1143 = vmul.f32 %v1138, %v1140
    %v1145 = vperm.slane %v1094, 0
    %v1147 = vadd.f32 %v1142, %v1145
    %v1148 = vadd.f32 %v1143, %v1145
    %s1149 = scalar_lea.vmem %s3, 32
    %v1150 = vld [vmem:[%s1149] sm:$0xff]
    %v1151 = vld [vmem:[%s1149 + $0x8] sm:$0xff]
    %v1152 = vld [vmem:[%s1149 + $0x10] sm:$0xff]
    %v1153 = vld [vmem:[%s1149 + $0x18] sm:$0xff]
    %s1154 = scalar_lea.vmem [#allocation7], 1
    %v1155 = vld [vmem:[%s1154] sm:$0x1]
    %v1157 = vperm.slane %v1155, 0
    %v1160 = vsel %vm219, %v1147, 0
    %v1163 = vsel %vm219, %v1148, 0
    %1165 = vmatpush.msra.mxu0 0.0
    %1166 = vmatpush.msra.mxu0 0.0
    %1167 = vmatpush.msra.mxu0 0.0
    %1168 = vmatpush.msra.mxu0 0.0
    %1169 = vmatpush.msra.mxu0 0.0
    %1170 = vmatpush.msra.mxu0 0.0
    %1171 = vmatpush.msra.mxu0 0.0
    %1172 = vmatpush.msra.mxu0 0.0
    %1173 = vmatpush.msra.mxu0 0.0
    %1174 = vmatpush.msra.mxu0 0.0
    %1175 = vmatpush.msra.mxu0 0.0
    %1176 = vmatpush.msra.mxu0 0.0
    %1177 = vmatpush.msra.mxu0 %v1153
    %1178 = vmatpush.msra.mxu0 %v1152
    %1179 = vmatpush.msra.mxu0 %v1151
    %1180 = vmatpush.msra.mxu0 %v1150
    %1181 = vmatmul.f32.gmra.mxu0 %v1160
    %v1182 = vpop.f32.mrf.mxu0
    %v1183 = vadd.f32 %v1157, %v1182
    %1184 = vmatmul.f32.gmra.mxu0 %v1163
    %v1185 = vpop.f32.mrf.mxu0
    %v1186 = vadd.f32 %v1157, %v1185
    %1187 = vdwg.mxu0
    %v1188 = vmul.f32 %v1183, 0.35355338
    %v1189 = vmul.f32 %v1186, 0.35355338
    %1191 = vrot.lane.b32.xlu0 %v1183, 96
    %v1192 = vpop.permute.xlu0 %1191
    %v1194 = vsel %vm254, %v1188, 0
    %v1196 = vsel %vm254, %v1192, 0
    %1198 = vmatpush.xpose.msra.mxu0 0.0
    %1199 = vmatpush.xpose.msra.mxu0 0.0
    %1200 = vmatpush.xpose.msra.mxu0 0.0
    %1201 = vmatpush.xpose.msra.mxu0 0.0
    %1202 = vmatpush.xpose.msra.mxu0 0.0
    %1203 = vmatpush.xpose.msra.mxu0 0.0
    %1204 = vmatpush.xpose.msra.mxu0 0.0
    %1205 = vmatpush.xpose.msra.mxu0 0.0
    %1206 = vmatpush.xpose.msra.mxu0 0.0
    %1207 = vmatpush.xpose.msra.mxu0 0.0
    %1208 = vmatpush.xpose.msra.mxu0 0.0
    %1209 = vmatpush.xpose.msra.mxu0 0.0
    %1210 = vmatpush.xpose.msra.mxu0 0.0
    %1211 = vmatpush.xpose.msra.mxu0 0.0
    %1212 = vmatpush.xpose.msra.mxu0 0.0
    %1213 = vmatpush.xpose.msra.mxu0 %v1196
    %1214 = vmatmul.f32.gmra.mxu0 %v1194
    %v1215 = vpop.f32.mrf.mxu0
    %v1216 = vadd.f32 %v210, %v1215
    %1217 = vdwg.mxu0
    %1219 = vrot.lane.b32.xlu0 %v1186, 96
    %v1220 = vpop.permute.xlu0 %1219
    %v1222 = vsel %vm254, %v1189, 0
    %v1224 = vsel %vm254, %v1220, 0
    %1226 = vmatpush.xpose.msra.mxu0 0.0
    %1227 = vmatpush.xpose.msra.mxu0 0.0
    %1228 = vmatpush.xpose.msra.mxu0 0.0
    %1229 = vmatpush.xpose.msra.mxu0 0.0
    %1230 = vmatpush.xpose.msra.mxu0 0.0
    %1231 = vmatpush.xpose.msra.mxu0 0.0
    %1232 = vmatpush.xpose.msra.mxu0 0.0
    %1233 = vmatpush.xpose.msra.mxu0 0.0
    %1234 = vmatpush.xpose.msra.mxu0 0.0
    %1235 = vmatpush.xpose.msra.mxu0 0.0
    %1236 = vmatpush.xpose.msra.mxu0 0.0
    %1237 = vmatpush.xpose.msra.mxu0 0.0
    %1238 = vmatpush.xpose.msra.mxu0 0.0
    %1239 = vmatpush.xpose.msra.mxu0 0.0
    %1240 = vmatpush.xpose.msra.mxu0 0.0
    %1241 = vmatpush.xpose.msra.mxu0 %v1224
    %1242 = vmatmul.f32.gmra.mxu0 %v1222
    %v1243 = vpop.f32.mrf.mxu0
    %v1244 = vadd.f32 %v210, %v1243
    %1245 = vdwg.mxu0
    %v1246 = vsel %vm254, %v1216, -inf
    %1247 = vmax.xlane.f32.xlu0 %v1246
    %v1248 = vpop.xlane.xlu0 %1247
    %v1249 = vsel %vm254, %v1244, -inf
    %1250 = vmax.xlane.f32.xlu0 %v1249
    %v1251 = vpop.xlane.xlu0 %1250
    %v1252 = vsub.f32 %v1216, %v1248
    %v1253 = vsub.f32 %v1244, %v1251
    %v1254 = vmul.f32 %v1252, 1.442695
    %v1255 = vpow.pop %v1254
    %v1256 = vmul.f32 %v1253, 1.442695
    %v1257 = vpow.pop %v1256
    %v1258 = vsel %vm254, %v1255, 0.0
    %1259 = vadd.xlane.f32.xlu0 %v1258
    %v1260 = vpop.xlane.xlu0 %1259
    %v1261 = vsel %vm254, %v1257, 0.0
    %1262 = vadd.xlane.f32.xlu0 %v1261
    %v1263 = vpop.xlane.xlu0 %1262
    %v1264 = vrcp.pop %v1260
    %v1265 = vmul.f32 %v1260, %v1264
    %v1266 = vsub.f32 1.0, %v1265
    %v1267 = vmul.f32 %v1264, %v1266
    %v1268 = vadd.f32 %v1264, %v1267
    %vm1269 = vweird.f32 %v1260
    %vm1270 = vweird.f32 %v1264
    %vm1271 = vmor %vm1269, %vm1270
    %v1272 = vsel %vm1271, %v1264, %v1268
    %v1273 = vand.u32 2147483647, %v1260
    %vm1274 = vcmp.eq.f32.partialorder %v1273, 8.507059e+37
    %v1275 = vand.u32 %v1260, 2147483648
    %v1276 = vor.u32 1.1754944e-38, %v1275
    %v1277 = vsel %vm1274, %v1276, %v1272
    %v1278 = vmul.f32 %v1255, %v1277
    %v1279 = vrcp.pop %v1263
    %v1280 = vmul.f32 %v1263, %v1279
    %v1281 = vsub.f32 1.0, %v1280
    %v1282 = vmul.f32 %v1279, %v1281
    %v1283 = vadd.f32 %v1279, %v1282
    %vm1284 = vweird.f32 %v1263
    %vm1285 = vweird.f32 %v1279
    %vm1286 = vmor %vm1284, %vm1285
    %v1287 = vsel %vm1286, %v1279, %v1283
    %v1288 = vand.u32 2147483647, %v1263
    %vm1289 = vcmp.eq.f32.partialorder %v1288, 8.507059e+37
    %v1290 = vand.u32 %v1263, 2147483648
    %v1291 = vor.u32 1.1754944e-38, %v1290
    %v1292 = vsel %vm1289, %v1291, %v1287
    %v1293 = vmul.f32 %v1257, %v1292
    %1294 = vrot.lane.b32.xlu0 %v1183, 64
    %v1295 = vpop.permute.xlu0 %1294
    %v1298 = vsel %vm254, %v1278, 0
    %1300 = vmatpush.msra.mxu0 0.0
    %1301 = vmatpush.msra.mxu0 0.0
    %1302 = vmatpush.msra.mxu0 0.0
    %1303 = vmatpush.msra.mxu0 0.0
    %1304 = vmatpush.msra.mxu0 0.0
    %1305 = vmatpush.msra.mxu0 0.0
    %1306 = vmatpush.msra.mxu0 0.0
    %1307 = vmatpush.msra.mxu0 0.0
    %1308 = vmatpush.msra.mxu0 0.0
    %1309 = vmatpush.msra.mxu0 0.0
    %1310 = vmatpush.msra.mxu0 0.0
    %1311 = vmatpush.msra.mxu0 0.0
    %1312 = vmatpush.msra.mxu0 0.0
    %1313 = vmatpush.msra.mxu0 0.0
    %1314 = vmatpush.msra.mxu0 0.0
    %1315 = vmatpush.msra.mxu0 %v1295
    %1316 = vmatmul.f32.gmra.mxu0 %v1298
    %v1317 = vpop.f32.mrf.mxu0
    %v1318 = vadd.f32 0.0, %v1317
    %1319 = vdwg.mxu0
    %1320 = vrot.lane.b32.xlu0 %v1186, 64
    %v1321 = vpop.permute.xlu0 %1320
    %v1324 = vsel %vm254, %v1293, 0
    %1326 = vmatpush.msra.mxu0 0.0
    %1327 = vmatpush.msra.mxu0 0.0
    %1328 = vmatpush.msra.mxu0 0.0
    %1329 = vmatpush.msra.mxu0 0.0
    %1330 = vmatpush.msra.mxu0 0.0
    %1331 = vmatpush.msra.mxu0 0.0
    %1332 = vmatpush.msra.mxu0 0.0
    %1333 = vmatpush.msra.mxu0 0.0
    %1334 = vmatpush.msra.mxu0 0.0
    %1335 = vmatpush.msra.mxu0 0.0
    %1336 = vmatpush.msra.mxu0 0.0
    %1337 = vmatpush.msra.mxu0 0.0
    %1338 = vmatpush.msra.mxu0 0.0
    %1339 = vmatpush.msra.mxu0 0.0
    %1340 = vmatpush.msra.mxu0 0.0
    %1341 = vmatpush.msra.mxu0 %v1321
    %1342 = vmatmul.f32.gmra.mxu0 %v1324
    %v1343 = vpop.f32.mrf.mxu0
    %v1344 = vadd.f32 0.0, %v1343
    %1345 = vdwg.mxu0
    %1346 = vrot.lane.b32.xlu0 %v1188, 120
    %v1347 = vpop.permute.xlu0 %1346
    %1348 = vrot.lane.b32.xlu0 %v1183, 88
    %v1349 = vpop.permute.xlu0 %1348
    %v1350 = vsel %vm254, %v1347, 0
    %v1352 = vsel %vm254, %v1349, 0
    %1354 = vmatpush.xpose.msra.mxu0 0.0
    %1355 = vmatpush.xpose.msra.mxu0 0.0
    %1356 = vmatpush.xpose.msra.mxu0 0.0
    %1357 = vmatpush.xpose.msra.mxu0 0.0
    %1358 = vmatpush.xpose.msra.mxu0 0.0
    %1359 = vmatpush.xpose.msra.mxu0 0.0
    %1360 = vmatpush.xpose.msra.mxu0 0.0
    %1361 = vmatpush.xpose.msra.mxu0 0.0
    %1362 = vmatpush.xpose.msra.mxu0 0.0
    %1363 = vmatpush.xpose.msra.mxu0 0.0
    %1364 = vmatpush.xpose.msra.mxu0 0.0
    %1365 = vmatpush.xpose.msra.mxu0 0.0
    %1366 = vmatpush.xpose.msra.mxu0 0.0
    %1367 = vmatpush.xpose.msra.mxu0 0.0
    %1368 = vmatpush.xpose.msra.mxu0 0.0
    %1369 = vmatpush.xpose.msra.mxu0 %v1352
    %1370 = vmatmul.f32.gmra.mxu0 %v1350
    %v1371 = vpop.f32.mrf.mxu0
    %v1372 = vadd.f32 %v210, %v1371
    %1373 = vdwg.mxu0
    %1374 = vrot.lane.b32.xlu0 %v1189, 120
    %v1375 = vpop.permute.xlu0 %1374
    %1376 = vrot.lane.b32.xlu0 %v1186, 88
    %v1377 = vpop.permute.xlu0 %1376
    %v1378 = vsel %vm254, %v1375, 0
    %v1380 = vsel %vm254, %v1377, 0
    %1382 = vmatpush.xpose.msra.mxu0 0.0
    %1383 = vmatpush.xpose.msra.mxu0 0.0
    %1384 = vmatpush.xpose.msra.mxu0 0.0
    %1385 = vmatpush.xpose.msra.mxu0 0.0
    %1386 = vmatpush.xpose.msra.mxu0 0.0
    %1387 = vmatpush.xpose.msra.mxu0 0.0
    %1388 = vmatpush.xpose.msra.mxu0 0.0
    %1389 = vmatpush.xpose.msra.mxu0 0.0
    %1390 = vmatpush.xpose.msra.mxu0 0.0
    %1391 = vmatpush.xpose.msra.mxu0 0.0
    %1392 = vmatpush.xpose.msra.mxu0 0.0
    %1393 = vmatpush.xpose.msra.mxu0 0.0
    %1394 = vmatpush.xpose.msra.mxu0 0.0
    %1395 = vmatpush.xpose.msra.mxu0 0.0
    %1396 = vmatpush.xpose.msra.mxu0 0.0
    %1397 = vmatpush.xpose.msra.mxu0 %v1380
    %1398 = vmatmul.f32.gmra.mxu0 %v1378
    %v1399 = vpop.f32.mrf.mxu0
    %v1400 = vadd.f32 %v210, %v1399
    %1401 = vdwg.mxu0
    %v1402 = vsel %vm254, %v1372, -inf
    %1403 = vmax.xlane.f32.xlu0 %v1402
    %v1404 = vpop.xlane.xlu0 %1403
    %v1405 = vsel %vm254, %v1400, -inf
    %1406 = vmax.xlane.f32.xlu0 %v1405
    %v1407 = vpop.xlane.xlu0 %1406
    %v1408 = vsub.f32 %v1372, %v1404
    %v1409 = vsub.f32 %v1400, %v1407
    %v1410 = vmul.f32 %v1408, 1.442695
    %v1411 = vpow.pop %v1410
    %v1412 = vmul.f32 %v1409, 1.442695
    %v1413 = vpow.pop %v1412
    %v1414 = vsel %vm254, %v1411, 0.0
    %1415 = vadd.xlane.f32.xlu0 %v1414
    %v1416 = vpop.xlane.xlu0 %1415
    %v1417 = vsel %vm254, %v1413, 0.0
    %1418 = vadd.xlane.f32.xlu0 %v1417
    %v1419 = vpop.xlane.xlu0 %1418
    %v1420 = vrcp.pop %v1416
    %v1421 = vmul.f32 %v1416, %v1420
    %v1422 = vsub.f32 1.0, %v1421
    %v1423 = vmul.f32 %v1420, %v1422
    %v1424 = vadd.f32 %v1420, %v1423
    %vm1425 = vweird.f32 %v1416
    %vm1426 = vweird.f32 %v1420
    %vm1427 = vmor %vm1425, %vm1426
    %v1428 = vsel %vm1427, %v1420, %v1424
    %v1429 = vand.u32 2147483647, %v1416
    %vm1430 = vcmp.eq.f32.partialorder %v1429, 8.507059e+37
    %v1431 = vand.u32 %v1416, 2147483648
    %v1432 = vor.u32 1.1754944e-38, %v1431
    %v1433 = vsel %vm1430, %v1432, %v1428
    %v1434 = vmul.f32 %v1411, %v1433
    %v1435 = vrcp.pop %v1419
    %v1436 = vmul.f32 %v1419, %v1435
    %v1437 = vsub.f32 1.0, %v1436
    %v1438 = vmul.f32 %v1435, %v1437
    %v1439 = vadd.f32 %v1435, %v1438
    %vm1440 = vweird.f32 %v1419
    %vm1441 = vweird.f32 %v1435
    %vm1442 = vmor %vm1440, %vm1441
    %v1443 = vsel %vm1442, %v1435, %v1439
    %v1444 = vand.u32 2147483647, %v1419
    %vm1445 = vcmp.eq.f32.partialorder %v1444, 8.507059e+37
    %v1446 = vand.u32 %v1419, 2147483648
    %v1447 = vor.u32 1.1754944e-38, %v1446
    %v1448 = vsel %vm1445, %v1447, %v1443
    %v1449 = vmul.f32 %v1413, %v1448
    %1450 = vrot.lane.b32.xlu0 %v1183, 56
    %v1451 = vpop.permute.xlu0 %1450
    %v1454 = vsel %vm254, %v1434, 0
    %1456 = vmatpush.msra.mxu0 0.0
    %1457 = vmatpush.msra.mxu0 0.0
    %1458 = vmatpush.msra.mxu0 0.0
    %1459 = vmatpush.msra.mxu0 0.0
    %1460 = vmatpush.msra.mxu0 0.0
    %1461 = vmatpush.msra.mxu0 0.0
    %1462 = vmatpush.msra.mxu0 0.0
    %1463 = vmatpush.msra.mxu0 0.0
    %1464 = vmatpush.msra.mxu0 0.0
    %1465 = vmatpush.msra.mxu0 0.0
    %1466 = vmatpush.msra.mxu0 0.0
    %1467 = vmatpush.msra.mxu0 0.0
    %1468 = vmatpush.msra.mxu0 0.0
    %1469 = vmatpush.msra.mxu0 0.0
    %1470 = vmatpush.msra.mxu0 0.0
    %1471 = vmatpush.msra.mxu0 %v1451
    %1472 = vmatmul.f32.gmra.mxu0 %v1454
    %v1473 = vpop.f32.mrf.mxu0
    %v1474 = vadd.f32 0.0, %v1473
    %1475 = vdwg.mxu0
    %1476 = vrot.lane.b32.xlu0 %v1186, 56
    %v1477 = vpop.permute.xlu0 %1476
    %v1480 = vsel %vm254, %v1449, 0
    %1482 = vmatpush.msra.mxu0 0.0
    %1483 = vmatpush.msra.mxu0 0.0
    %1484 = vmatpush.msra.mxu0 0.0
    %1485 = vmatpush.msra.mxu0 0.0
    %1486 = vmatpush.msra.mxu0 0.0
    %1487 = vmatpush.msra.mxu0 0.0
    %1488 = vmatpush.msra.mxu0 0.0
    %1489 = vmatpush.msra.mxu0 0.0
    %1490 = vmatpush.msra.mxu0 0.0
    %1491 = vmatpush.msra.mxu0 0.0
    %1492 = vmatpush.msra.mxu0 0.0
    %1493 = vmatpush.msra.mxu0 0.0
    %1494 = vmatpush.msra.mxu0 0.0
    %1495 = vmatpush.msra.mxu0 0.0
    %1496 = vmatpush.msra.mxu0 0.0
    %1497 = vmatpush.msra.mxu0 %v1477
    %1498 = vmatmul.f32.gmra.mxu0 %v1480
    %v1499 = vpop.f32.mrf.mxu0
    %v1500 = vadd.f32 0.0, %v1499
    %1501 = vdwg.mxu0
    %1502 = vrot.lane.b32.xlu0 %v1188, 112
    %v1503 = vpop.permute.xlu0 %1502
    %1504 = vrot.lane.b32.xlu0 %v1183, 80
    %v1505 = vpop.permute.xlu0 %1504
    %v1506 = vsel %vm254, %v1503, 0
    %v1508 = vsel %vm254, %v1505, 0
    %1510 = vmatpush.xpose.msra.mxu0 0.0
    %1511 = vmatpush.xpose.msra.mxu0 0.0
    %1512 = vmatpush.xpose.msra.mxu0 0.0
    %1513 = vmatpush.xpose.msra.mxu0 0.0
    %1514 = vmatpush.xpose.msra.mxu0 0.0
    %1515 = vmatpush.xpose.msra.mxu0 0.0
    %1516 = vmatpush.xpose.msra.mxu0 0.0
    %1517 = vmatpush.xpose.msra.mxu0 0.0
    %1518 = vmatpush.xpose.msra.mxu0 0.0
    %1519 = vmatpush.xpose.msra.mxu0 0.0
    %1520 = vmatpush.xpose.msra.mxu0 0.0
    %1521 = vmatpush.xpose.msra.mxu0 0.0
    %1522 = vmatpush.xpose.msra.mxu0 0.0
    %1523 = vmatpush.xpose.msra.mxu0 0.0
    %1524 = vmatpush.xpose.msra.mxu0 0.0
    %1525 = vmatpush.xpose.msra.mxu0 %v1508
    %1526 = vmatmul.f32.gmra.mxu0 %v1506
    %v1527 = vpop.f32.mrf.mxu0
    %v1528 = vadd.f32 %v210, %v1527
    %1529 = vdwg.mxu0
    %1530 = vrot.lane.b32.xlu0 %v1189, 112
    %v1531 = vpop.permute.xlu0 %1530
    %1532 = vrot.lane.b32.xlu0 %v1186, 80
    %v1533 = vpop.permute.xlu0 %1532
    %v1534 = vsel %vm254, %v1531, 0
    %v1536 = vsel %vm254, %v1533, 0
    %1538 = vmatpush.xpose.msra.mxu0 0.0
    %1539 = vmatpush.xpose.msra.mxu0 0.0
    %1540 = vmatpush.xpose.msra.mxu0 0.0
    %1541 = vmatpush.xpose.msra.mxu0 0.0
    %1542 = vmatpush.xpose.msra.mxu0 0.0
    %1543 = vmatpush.xpose.msra.mxu0 0.0
    %1544 = vmatpush.xpose.msra.mxu0 0.0
    %1545 = vmatpush.xpose.msra.mxu0 0.0
    %1546 = vmatpush.xpose.msra.mxu0 0.0
    %1547 = vmatpush.xpose.msra.mxu0 0.0
    %1548 = vmatpush.xpose.msra.mxu0 0.0
    %1549 = vmatpush.xpose.msra.mxu0 0.0
    %1550 = vmatpush.xpose.msra.mxu0 0.0
    %1551 = vmatpush.xpose.msra.mxu0 0.0
    %1552 = vmatpush.xpose.msra.mxu0 0.0
    %1553 = vmatpush.xpose.msra.mxu0 %v1536
    %1554 = vmatmul.f32.gmra.mxu0 %v1534
    %v1555 = vpop.f32.mrf.mxu0
    %v1556 = vadd.f32 %v210, %v1555
    %1557 = vdwg.mxu0
    %v1558 = vsel %vm254, %v1528, -inf
    %1559 = vmax.xlane.f32.xlu0 %v1558
    %v1560 = vpop.xlane.xlu0 %1559
    %v1561 = vsel %vm254, %v1556, -inf
    %1562 = vmax.xlane.f32.xlu0 %v1561
    %v1563 = vpop.xlane.xlu0 %1562
    %v1564 = vsub.f32 %v1528, %v1560
    %v1565 = vsub.f32 %v1556, %v1563
    %v1566 = vmul.f32 %v1564, 1.442695
    %v1567 = vpow.pop %v1566
    %v1568 = vmul.f32 %v1565, 1.442695
    %v1569 = vpow.pop %v1568
    %v1570 = vsel %vm254, %v1567, 0.0
    %1571 = vadd.xlane.f32.xlu0 %v1570
    %v1572 = vpop.xlane.xlu0 %1571
    %v1573 = vsel %vm254, %v1569, 0.0
    %1574 = vadd.xlane.f32.xlu0 %v1573
    %v1575 = vpop.xlane.xlu0 %1574
    %v1576 = vrcp.pop %v1572
    %v1577 = vmul.f32 %v1572, %v1576
    %v1578 = vsub.f32 1.0, %v1577
    %v1579 = vmul.f32 %v1576, %v1578
    %v1580 = vadd.f32 %v1576, %v1579
    %vm1581 = vweird.f32 %v1572
    %vm1582 = vweird.f32 %v1576
    %vm1583 = vmor %vm1581, %vm1582
    %v1584 = vsel %vm1583, %v1576, %v1580
    %v1585 = vand.u32 2147483647, %v1572
    %vm1586 = vcmp.eq.f32.partialorder %v1585, 8.507059e+37
    %v1587 = vand.u32 %v1572, 2147483648
    %v1588 = vor.u32 1.1754944e-38, %v1587
    %v1589 = vsel %vm1586, %v1588, %v1584
    %v1590 = vmul.f32 %v1567, %v1589
    %v1591 = vrcp.pop %v1575
    %v1592 = vmul.f32 %v1575, %v1591
    %v1593 = vsub.f32 1.0, %v1592
    %v1594 = vmul.f32 %v1591, %v1593
    %v1595 = vadd.f32 %v1591, %v1594
    %vm1596 = vweird.f32 %v1575
    %vm1597 = vweird.f32 %v1591
    %vm1598 = vmor %vm1596, %vm1597
    %v1599 = vsel %vm1598, %v1591, %v1595
    %v1600 = vand.u32 2147483647, %v1575
    %vm1601 = vcmp.eq.f32.partialorder %v1600, 8.507059e+37
    %v1602 = vand.u32 %v1575, 2147483648
    %v1603 = vor.u32 1.1754944e-38, %v1602
    %v1604 = vsel %vm1601, %v1603, %v1599
    %v1605 = vmul.f32 %v1569, %v1604
    %1606 = vrot.lane.b32.xlu0 %v1183, 48
    %v1607 = vpop.permute.xlu0 %1606
    %v1610 = vsel %vm254, %v1590, 0
    %1612 = vmatpush.msra.mxu0 0.0
    %1613 = vmatpush.msra.mxu0 0.0
    %1614 = vmatpush.msra.mxu0 0.0
    %1615 = vmatpush.msra.mxu0 0.0
    %1616 = vmatpush.msra.mxu0 0.0
    %1617 = vmatpush.msra.mxu0 0.0
    %1618 = vmatpush.msra.mxu0 0.0
    %1619 = vmatpush.msra.mxu0 0.0
    %1620 = vmatpush.msra.mxu0 0.0
    %1621 = vmatpush.msra.mxu0 0.0
    %1622 = vmatpush.msra.mxu0 0.0
    %1623 = vmatpush.msra.mxu0 0.0
    %1624 = vmatpush.msra.mxu0 0.0
    %1625 = vmatpush.msra.mxu0 0.0
    %1626 = vmatpush.msra.mxu0 0.0
    %1627 = vmatpush.msra.mxu0 %v1607
    %1628 = vmatmul.f32.gmra.mxu0 %v1610
    %v1629 = vpop.f32.mrf.mxu0
    %v1630 = vadd.f32 0.0, %v1629
    %1631 = vdwg.mxu0
    %1632 = vrot.lane.b32.xlu0 %v1186, 48
    %v1633 = vpop.permute.xlu0 %1632
    %v1636 = vsel %vm254, %v1605, 0
    %1638 = vmatpush.msra.mxu0 0.0
    %1639 = vmatpush.msra.mxu0 0.0
    %1640 = vmatpush.msra.mxu0 0.0
    %1641 = vmatpush.msra.mxu0 0.0
    %1642 = vmatpush.msra.mxu0 0.0
    %1643 = vmatpush.msra.mxu0 0.0
    %1644 = vmatpush.msra.mxu0 0.0
    %1645 = vmatpush.msra.mxu0 0.0
    %1646 = vmatpush.msra.mxu0 0.0
    %1647 = vmatpush.msra.mxu0 0.0
    %1648 = vmatpush.msra.mxu0 0.0
    %1649 = vmatpush.msra.mxu0 0.0
    %1650 = vmatpush.msra.mxu0 0.0
    %1651 = vmatpush.msra.mxu0 0.0
    %1652 = vmatpush.msra.mxu0 0.0
    %1653 = vmatpush.msra.mxu0 %v1633
    %1654 = vmatmul.f32.gmra.mxu0 %v1636
    %v1655 = vpop.f32.mrf.mxu0
    %v1656 = vadd.f32 0.0, %v1655
    %1657 = vdwg.mxu0
    %1658 = vrot.lane.b32.xlu0 %v1188, 104
    %v1659 = vpop.permute.xlu0 %1658
    %1660 = vrot.lane.b32.xlu0 %v1183, 72
    %v1661 = vpop.permute.xlu0 %1660
    %v1662 = vsel %vm254, %v1659, 0
    %v1664 = vsel %vm254, %v1661, 0
    %1666 = vmatpush.xpose.msra.mxu0 0.0
    %1667 = vmatpush.xpose.msra.mxu0 0.0
    %1668 = vmatpush.xpose.msra.mxu0 0.0
    %1669 = vmatpush.xpose.msra.mxu0 0.0
    %1670 = vmatpush.xpose.msra.mxu0 0.0
    %1671 = vmatpush.xpose.msra.mxu0 0.0
    %1672 = vmatpush.xpose.msra.mxu0 0.0
    %1673 = vmatpush.xpose.msra.mxu0 0.0
    %1674 = vmatpush.xpose.msra.mxu0 0.0
    %1675 = vmatpush.xpose.msra.mxu0 0.0
    %1676 = vmatpush.xpose.msra.mxu0 0.0
    %1677 = vmatpush.xpose.msra.mxu0 0.0
    %1678 = vmatpush.xpose.msra.mxu0 0.0
    %1679 = vmatpush.xpose.msra.mxu0 0.0
    %1680 = vmatpush.xpose.msra.mxu0 0.0
    %1681 = vmatpush.xpose.msra.mxu0 %v1664
    %1682 = vmatmul.f32.gmra.mxu0 %v1662
    %v1683 = vpop.f32.mrf.mxu0
    %v1684 = vadd.f32 %v210, %v1683
    %1685 = vdwg.mxu0
    %1686 = vrot.lane.b32.xlu0 %v1189, 104
    %v1687 = vpop.permute.xlu0 %1686
    %1688 = vrot.lane.b32.xlu0 %v1186, 72
    %v1689 = vpop.permute.xlu0 %1688
    %v1690 = vsel %vm254, %v1687, 0
    %v1692 = vsel %vm254, %v1689, 0
    %1694 = vmatpush.xpose.msra.mxu0 0.0
    %1695 = vmatpush.xpose.msra.mxu0 0.0
    %1696 = vmatpush.xpose.msra.mxu0 0.0
    %1697 = vmatpush.xpose.msra.mxu0 0.0
    %1698 = vmatpush.xpose.msra.mxu0 0.0
    %1699 = vmatpush.xpose.msra.mxu0 0.0
    %1700 = vmatpush.xpose.msra.mxu0 0.0
    %1701 = vmatpush.xpose.msra.mxu0 0.0
    %1702 = vmatpush.xpose.msra.mxu0 0.0
    %1703 = vmatpush.xpose.msra.mxu0 0.0
    %1704 = vmatpush.xpose.msra.mxu0 0.0
    %1705 = vmatpush.xpose.msra.mxu0 0.0
    %1706 = vmatpush.xpose.msra.mxu0 0.0
    %1707 = vmatpush.xpose.msra.mxu0 0.0
    %1708 = vmatpush.xpose.msra.mxu0 0.0
    %1709 = vmatpush.xpose.msra.mxu0 %v1692
    %1710 = vmatmul.f32.gmra.mxu0 %v1690
    %v1711 = vpop.f32.mrf.mxu0
    %v1712 = vadd.f32 %v210, %v1711
    %1713 = vdwg.mxu0
    %v1714 = vsel %vm254, %v1684, -inf
    %1715 = vmax.xlane.f32.xlu0 %v1714
    %v1716 = vpop.xlane.xlu0 %1715
    %v1717 = vsel %vm254, %v1712, -inf
    %1718 = vmax.xlane.f32.xlu0 %v1717
    %v1719 = vpop.xlane.xlu0 %1718
    %v1720 = vsub.f32 %v1684, %v1716
    %v1721 = vsub.f32 %v1712, %v1719
    %v1722 = vmul.f32 %v1720, 1.442695
    %v1723 = vpow.pop %v1722
    %v1724 = vmul.f32 %v1721, 1.442695
    %v1725 = vpow.pop %v1724
    %v1726 = vsel %vm254, %v1723, 0.0
    %1727 = vadd.xlane.f32.xlu0 %v1726
    %v1728 = vpop.xlane.xlu0 %1727
    %v1729 = vsel %vm254, %v1725, 0.0
    %1730 = vadd.xlane.f32.xlu0 %v1729
    %v1731 = vpop.xlane.xlu0 %1730
    %v1732 = vrcp.pop %v1728
    %v1733 = vmul.f32 %v1728, %v1732
    %v1734 = vsub.f32 1.0, %v1733
    %v1735 = vmul.f32 %v1732, %v1734
    %v1736 = vadd.f32 %v1732, %v1735
    %vm1737 = vweird.f32 %v1728
    %vm1738 = vweird.f32 %v1732
    %vm1739 = vmor %vm1737, %vm1738
    %v1740 = vsel %vm1739, %v1732, %v1736
    %v1741 = vand.u32 2147483647, %v1728
    %vm1742 = vcmp.eq.f32.partialorder %v1741, 8.507059e+37
    %v1743 = vand.u32 %v1728, 2147483648
    %v1744 = vor.u32 1.1754944e-38, %v1743
    %v1745 = vsel %vm1742, %v1744, %v1740
    %v1746 = vmul.f32 %v1723, %v1745
    %v1747 = vrcp.pop %v1731
    %v1748 = vmul.f32 %v1731, %v1747
    %v1749 = vsub.f32 1.0, %v1748
    %v1750 = vmul.f32 %v1747, %v1749
    %v1751 = vadd.f32 %v1747, %v1750
    %vm1752 = vweird.f32 %v1731
    %vm1753 = vweird.f32 %v1747
    %vm1754 = vmor %vm1752, %vm1753
    %v1755 = vsel %vm1754, %v1747, %v1751
    %v1756 = vand.u32 2147483647, %v1731
    %vm1757 = vcmp.eq.f32.partialorder %v1756, 8.507059e+37
    %v1758 = vand.u32 %v1731, 2147483648
    %v1759 = vor.u32 1.1754944e-38, %v1758
    %v1760 = vsel %vm1757, %v1759, %v1755
    %v1761 = vmul.f32 %v1725, %v1760
    %1762 = vrot.lane.b32.xlu0 %v1183, 40
    %v1763 = vpop.permute.xlu0 %1762
    %v1766 = vsel %vm254, %v1746, 0
    %1768 = vmatpush.msra.mxu0 0.0
    %1769 = vmatpush.msra.mxu0 0.0
    %1770 = vmatpush.msra.mxu0 0.0
    %1771 = vmatpush.msra.mxu0 0.0
    %1772 = vmatpush.msra.mxu0 0.0
    %1773 = vmatpush.msra.mxu0 0.0
    %1774 = vmatpush.msra.mxu0 0.0
    %1775 = vmatpush.msra.mxu0 0.0
    %1776 = vmatpush.msra.mxu0 0.0
    %1777 = vmatpush.msra.mxu0 0.0
    %1778 = vmatpush.msra.mxu0 0.0
    %1779 = vmatpush.msra.mxu0 0.0
    %1780 = vmatpush.msra.mxu0 0.0
    %1781 = vmatpush.msra.mxu0 0.0
    %1782 = vmatpush.msra.mxu0 0.0
    %1783 = vmatpush.msra.mxu0 %v1763
    %1784 = vmatmul.f32.gmra.mxu0 %v1766
    %v1785 = vpop.f32.mrf.mxu0
    %v1786 = vadd.f32 0.0, %v1785
    %1787 = vdwg.mxu0
    %1788 = vrot.lane.b32.xlu0 %v1186, 40
    %v1789 = vpop.permute.xlu0 %1788
    %v1792 = vsel %vm254, %v1761, 0
    %1794 = vmatpush.msra.mxu0 0.0
    %1795 = vmatpush.msra.mxu0 0.0
    %1796 = vmatpush.msra.mxu0 0.0
    %1797 = vmatpush.msra.mxu0 0.0
    %1798 = vmatpush.msra.mxu0 0.0
    %1799 = vmatpush.msra.mxu0 0.0
    %1800 = vmatpush.msra.mxu0 0.0
    %1801 = vmatpush.msra.mxu0 0.0
    %1802 = vmatpush.msra.mxu0 0.0
    %1803 = vmatpush.msra.mxu0 0.0
    %1804 = vmatpush.msra.mxu0 0.0
    %1805 = vmatpush.msra.mxu0 0.0
    %1806 = vmatpush.msra.mxu0 0.0
    %1807 = vmatpush.msra.mxu0 0.0
    %1808 = vmatpush.msra.mxu0 0.0
    %1809 = vmatpush.msra.mxu0 %v1789
    %1810 = vmatmul.f32.gmra.mxu0 %v1792
    %v1811 = vpop.f32.mrf.mxu0
    %v1812 = vadd.f32 0.0, %v1811
    %1813 = vdwg.mxu0
    %1816 = vrot.lane.b32.xlu0 %v1474, 8
    %v1817 = vpop.permute.xlu0 %1816
    %1818 = vrot.lane.b32.xlu0 %v1500, 8
    %v1819 = vpop.permute.xlu0 %1818
    %1824 = vrot.lane.b32.xlu0 %v1630, 16
    %v1825 = vpop.permute.xlu0 %1824
    %1826 = vrot.lane.b32.xlu0 %v1656, 16
    %v1827 = vpop.permute.xlu0 %1826
    %1832 = vrot.lane.b32.xlu0 %v1786, 24
    %v1833 = vpop.permute.xlu0 %1832
    %1834 = vrot.lane.b32.xlu0 %v1812, 24
    %v1835 = vpop.permute.xlu0 %1834
    %v1838 = vsel %vm254, %v1318, %v1817
    %v1839 = vsel %vm254, %v1344, %v1819
    %v1840 = vsel %vm902, %v1838, %v1825
    %v1841 = vsel %vm902, %v1839, %v1827
    %v1842 = vsel %vm905, %v1840, %v1833
    %v1843 = vsel %vm905, %v1841, %v1835
    %s1844 = scalar_lea.vmem %s5, 32
    %v1845 = vld [vmem:[%s1844] sm:$0xff]
    %v1846 = vld [vmem:[%s1844 + $0x8] sm:$0xff]
    %v1847 = vld [vmem:[%s1844 + $0x10] sm:$0xff]
    %v1848 = vld [vmem:[%s1844 + $0x18] sm:$0xff]
    %s1849 = scalar_lea.vmem [#allocation8], 1
    %v1850 = vld [vmem:[%s1849] sm:$0x1]
    %v1852 = vperm.slane %v1850, 0
    %v1855 = vsel %vm219, %v1842, 0
    %v1858 = vsel %vm219, %v1843, 0
    %1860 = vmatpush.msra.mxu0 0.0
    %1861 = vmatpush.msra.mxu0 0.0
    %1862 = vmatpush.msra.mxu0 0.0
    %1863 = vmatpush.msra.mxu0 0.0
    %1864 = vmatpush.msra.mxu0 0.0
    %1865 = vmatpush.msra.mxu0 0.0
    %1866 = vmatpush.msra.mxu0 0.0
    %1867 = vmatpush.msra.mxu0 0.0
    %1868 = vmatpush.msra.mxu0 0.0
    %1869 = vmatpush.msra.mxu0 0.0
    %1870 = vmatpush.msra.mxu0 0.0
    %1871 = vmatpush.msra.mxu0 0.0
    %1872 = vmatpush.msra.mxu0 %v1848
    %1873 = vmatpush.msra.mxu0 %v1847
    %1874 = vmatpush.msra.mxu0 %v1846
    %1875 = vmatpush.msra.mxu0 %v1845
    %1876 = vmatmul.f32.gmra.mxu0 %v1855
    %v1877 = vpop.f32.mrf.mxu0
    %v1878 = vadd.f32 %v1852, %v1877
    %1879 = vmatmul.f32.gmra.mxu0 %v1858
    %v1880 = vpop.f32.mrf.mxu0
    %v1881 = vadd.f32 %v1852, %v1880
    %1882 = vdwg.mxu0
    %v1883 = vadd.f32 %v1147, %v1878
    %v1884 = vadd.f32 %v1148, %v1881
    %s1885 = scalar_lea.vmem [#allocation10], 1
    %v1886 = vld [vmem:[%s1885] sm:$0x1]
    %s1887 = scalar_lea.vmem [#allocation11], 1
    %v1888 = vld [vmem:[%s1887] sm:$0x1]
    %v1889 = vsel %vm219, %v1883, 0.0
    %1890 = vadd.xlane.f32.xlu0 %v1889
    %v1891 = vpop.xlane.xlu0 %1890
    %v1892 = vsel %vm219, %v1884, 0.0
    %1893 = vadd.xlane.f32.xlu0 %v1892
    %v1894 = vpop.xlane.xlu0 %1893
    %v1895 = vmul.f32 %v1891, %v961
    %v1896 = vmul.f32 %v1894, %v961
    %v1897 = vsub.f32 %v1883, %v1895
    %v1898 = vsub.f32 %v1884, %v1896
    %v1899 = vmul.f32 %v1897, %v1897
    %v1900 = vmul.f32 %v1898, %v1898
    %v1901 = vsel %vm219, %v1899, 0.0
    %1902 = vadd.xlane.f32.xlu0 %v1901
    %v1903 = vpop.xlane.xlu0 %1902
    %v1904 = vsel %vm219, %v1900, 0.0
    %1905 = vadd.xlane.f32.xlu0 %v1904
    %v1906 = vpop.xlane.xlu0 %1905
    %v1907 = vmul.f32 %v1903, %v961
    %v1908 = vmul.f32 %v1906, %v961
    %v1909 = vadd.f32 %v1907, 1e-05
    %v1910 = vadd.f32 %v1908, 1e-05
    %v1911 = vrsqrt.pop %v1909
    %v1912 = vmul.f32 %v1911, %v1909
    %v1913 = vmul.f32 %v1912, %v1911
    %v1914 = vmul.f32 0.5, %v1913
    %v1915 = vsub.f32 1.5, %v1914
    %v1916 = vmul.f32 %v1911, %v1915
    %vm1917 = vweird.f32 %v1909
    %vm1918 = vweird.f32 %v1911
    %vm1919 = vmor %vm1917, %vm1918
    %v1920 = vsel %vm1919, %v1911, %v1916
    %v1921 = vrsqrt.pop %v1910
    %v1922 = vmul.f32 %v1921, %v1910
    %v1923 = vmul.f32 %v1922, %v1921
    %v1924 = vmul.f32 0.5, %v1923
    %v1925 = vsub.f32 1.5, %v1924
    %v1926 = vmul.f32 %v1921, %v1925
    %vm1927 = vweird.f32 %v1910
    %vm1928 = vweird.f32 %v1921
    %vm1929 = vmor %vm1927, %vm1928
    %v1930 = vsel %vm1929, %v1921, %v1926
    %v1931 = vmul.f32 %v1897, %v1920
    %v1932 = vmul.f32 %v1898, %v1930
    %v1934 = vperm.slane %v1886, 0
    %v1936 = vmul.f32 %v1931, %v1934
    %v1937 = vmul.f32 %v1932, %v1934
    %v1939 = vperm.slane %v1888, 0
    %v1941 = vadd.f32 %v1936, %v1939
    %v1942 = vadd.f32 %v1937, %v1939
    %s1943 = scalar_lea.vmem %s9, 32
    %v1944 = vld [vmem:[%s1943] sm:$0xff]
    %v1945 = vld [vmem:[%s1943 + $0x8] sm:$0xff]
    %v1946 = vld [vmem:[%s1943 + $0x10] sm:$0xff]
    %v1947 = vld [vmem:[%s1943 + $0x18] sm:$0xff]
    %s1948 = scalar_lea.vmem [#allocation13], 1
    %v1949 = vld [vmem:[%s1948] sm:$0x1]
    %v1951 = vperm.slane %v1949, 0
    %v1954 = vsel %vm219, %v1941, 0
    %v1957 = vsel %vm219, %v1942, 0
    %1959 = vmatpush.msra.mxu0 0.0
    %1960 = vmatpush.msra.mxu0 0.0
    %1961 = vmatpush.msra.mxu0 0.0
    %1962 = vmatpush.msra.mxu0 0.0
    %1963 = vmatpush.msra.mxu0 0.0
    %1964 = vmatpush.msra.mxu0 0.0
    %1965 = vmatpush.msra.mxu0 0.0
    %1966 = vmatpush.msra.mxu0 0.0
    %1967 = vmatpush.msra.mxu0 0.0
    %1968 = vmatpush.msra.mxu0 0.0
    %1969 = vmatpush.msra.mxu0 0.0
    %1970 = vmatpush.msra.mxu0 0.0
    %1971 = vmatpush.msra.mxu0 %v1947
    %1972 = vmatpush.msra.mxu0 %v1946
    %1973 = vmatpush.msra.mxu0 %v1945
    %1974 = vmatpush.msra.mxu0 %v1944
    %1975 = vmatmul.f32.gmra.mxu0 %v1954
    %v1976 = vpop.f32.mrf.mxu0
    %v1977 = vadd.f32 %v1951, %v1976
    %1978 = vmatmul.f32.gmra.mxu0 %v1957
    %v1979 = vpop.f32.mrf.mxu0
    %v1980 = vadd.f32 %v1951, %v1979
    %1981 = vdwg.mxu0
    %v1982 = vmax.f32 %v1977, 0.0
    %v1983 = vmax.f32 %v1980, 0.0
    %s1984 = scalar_lea.vmem %s11, 64
    %v1985 = vld [vmem:[%s1984] sm:$0xff]
    %v1986 = vld [vmem:[%s1984 + $0x8] sm:$0xff]
    %v1987 = vld [vmem:[%s1984 + $0x10] sm:$0xff]
    %v1988 = vld [vmem:[%s1984 + $0x18] sm:$0xff]
    %v1989 = vld [vmem:[%s1984 + $0x20] sm:$0xff]
    %v1990 = vld [vmem:[%s1984 + $0x28] sm:$0xff]
    %v1991 = vld [vmem:[%s1984 + $0x30] sm:$0xff]
    %v1992 = vld [vmem:[%s1984 + $0x38] sm:$0xff]
    %s1993 = scalar_lea.vmem [#allocation14], 1
    %v1994 = vld [vmem:[%s1993] sm:$0x1]
    %v1996 = vperm.slane %v1994, 0
    %v1999 = vsel %vm1061, %v1982, 0
    %v2002 = vsel %vm1061, %v1983, 0
    %2004 = vmatpush.msra.mxu0 0.0
    %2005 = vmatpush.msra.mxu0 0.0
    %2006 = vmatpush.msra.mxu0 0.0
    %2007 = vmatpush.msra.mxu0 0.0
    %2008 = vmatpush.msra.mxu0 0.0
    %2009 = vmatpush.msra.mxu0 0.0
    %2010 = vmatpush.msra.mxu0 0.0
    %2011 = vmatpush.msra.mxu0 0.0
    %2012 = vmatpush.msra.mxu0 %v1992
    %2013 = vmatpush.msra.mxu0 %v1991
    %2014 = vmatpush.msra.mxu0 %v1990
    %2015 = vmatpush.msra.mxu0 %v1989
    %2016 = vmatpush.msra.mxu0 %v1988
    %2017 = vmatpush.msra.mxu0 %v1987
    %2018 = vmatpush.msra.mxu0 %v1986
    %2019 = vmatpush.msra.mxu0 %v1985
    %2020 = vmatmul.f32.gmra.mxu0 %v1999
    %v2021 = vpop.f32.mrf.mxu0
    %v2022 = vadd.f32 %v1996, %v2021
    %2023 = vmatmul.f32.gmra.mxu0 %v2002
    %v2024 = vpop.f32.mrf.mxu0
    %v2025 = vadd.f32 %v1996, %v2024
    %2026 = vdwg.mxu0
    %v2027 = vadd.f32 %v1941, %v2022
    %v2028 = vadd.f32 %v1942, %v2025
    %s2029 = scalar_lea.vmem [#allocation16], 1
    %v2030 = vld [vmem:[%s2029] sm:$0x1]
    %s2031 = scalar_lea.vmem [#allocation17], 1
    %v2032 = vld [vmem:[%s2031] sm:$0x1]
    %v2033 = vsel %vm219, %v2027, 0.0
    %2034 = vadd.xlane.f32.xlu0 %v2033
    %v2035 = vpop.xlane.xlu0 %2034
    %v2036 = vsel %vm219, %v2028, 0.0
    %2037 = vadd.xlane.f32.xlu0 %v2036
    %v2038 = vpop.xlane.xlu0 %2037
    %v2039 = vmul.f32 %v2035, %v961
    %v2040 = vmul.f32 %v2038, %v961
    %v2041 = vsub.f32 %v2027, %v2039
    %v2042 = vsub.f32 %v2028, %v2040
    %v2043 = vmul.f32 %v2041, %v2041
    %v2044 = vmul.f32 %v2042, %v2042
    %v2045 = vsel %vm219, %v2043, 0.0
    %2046 = vadd.xlane.f32.xlu0 %v2045
    %v2047 = vpop.xlane.xlu0 %2046
    %v2048 = vsel %vm219, %v2044, 0.0
    %2049 = vadd.xlane.f32.xlu0 %v2048
    %v2050 = vpop.xlane.xlu0 %2049
    %v2051 = vmul.f32 %v2047, %v961
    %v2052 = vmul.f32 %v2050, %v961
    %v2053 = vadd.f32 %v2051, 1e-05
    %v2054 = vadd.f32 %v2052, 1e-05
    %v2055 = vrsqrt.pop %v2053
    %v2056 = vmul.f32 %v2055, %v2053
    %v2057 = vmul.f32 %v2056, %v2055
    %v2058 = vmul.f32 0.5, %v2057
    %v2059 = vsub.f32 1.5, %v2058
    %v2060 = vmul.f32 %v2055, %v2059
    %vm2061 = vweird.f32 %v2053
    %vm2062 = vweird.f32 %v2055
    %vm2063 = vmor %vm2061, %vm2062
    %v2064 = vsel %vm2063, %v2055, %v2060
    %v2065 = vrsqrt.pop %v2054
    %v2066 = vmul.f32 %v2065, %v2054
    %v2067 = vmul.f32 %v2066, %v2065
    %v2068 = vmul.f32 0.5, %v2067
    %v2069 = vsub.f32 1.5, %v2068
    %v2070 = vmul.f32 %v2065, %v2069
    %vm2071 = vweird.f32 %v2054
    %vm2072 = vweird.f32 %v2065
    %vm2073 = vmor %vm2071, %vm2072
    %v2074 = vsel %vm2073, %v2065, %v2070
    %v2075 = vmul.f32 %v2041, %v2064
    %v2076 = vmul.f32 %v2042, %v2074
    %v2078 = vperm.slane %v2030, 0
    %v2080 = vmul.f32 %v2075, %v2078
    %v2081 = vmul.f32 %v2076, %v2078
    %v2083 = vperm.slane %v2032, 0
    %v2085 = vadd.f32 %v2080, %v2083
    %v2086 = vadd.f32 %v2081, %v2083
    %2087 = vst.msk [vmem:[#allocation19] sm:$0xff] %vm219, %v2085
    %2088 = vst.msk [vmem:[#allocation19 + $0x8] sm:$0xff] %vm219, %v2086
    // Predicated region
    $region102: #{sequence_encoder_forward.1} parent=1 // pred_check
      _
    $region103: #{sequence_encoder_forward.1} parent=1 // pred_check_branch
      %2090 = sbr.rel (0) target = $region105
    $region104: #{sequence_encoder_forward.1} parent=1 // pred_region
      %2092 = vsyncadd [#allocation4], 0
      %s2093 = sshll.u32 [#allocation19], 4
      %s2094 = int_to_ptr.vmem [resolvable:$true] %s2093
      %s2095 = sshll.u32 %s15, 4
      %s2096 = int_to_ptr.hbm [resolvable:$true] %s2095
      %2101 = dma.vmem_to_hbm [thread:$0]  %s2094, 256, %s2096, [#allocation4], 128, 128, 8
    $region105: #{sequence_encoder_forward.1} parent=1 // pred_fallthru
      _
    // Predicated region
    $region106: #{sequence_encoder_forward.1} parent=1 // pred_check
      _
    $region107: #{sequence_encoder_forward.1} parent=1 // pred_check_branch
      %2103 = sbr.rel (0) target = $region109
    $region108: #{sequence_encoder_forward.1} parent=1 // pred_region
      %2105 = dma.done [#allocation4], 256
    $region109: #{sequence_encoder_forward.1} parent=1 // pred_fallthru
      _
    %2106 = vsyncpa [#allocation3], 1
    %2107 = vsyncpa [#allocation6], 1
    %2108 = vsyncpa [#allocation9], 1
    %2109 = vsyncpa [#allocation12], 1
    %2110 = vsyncpa [#allocation15], 1
    %2111 = vsyncpa [#allocation18], 1
    %2112 = vsyncpa [#allocation4], 1

</llo_original>
